<compile_context>
chip_gen: v7x
topology: tpu7x:2x2x1
jax: 0.10.0
libtpu: 0.0.40
codegen_flags: <defaults>
</compile_context>

<pallas_src>
import functools

import jax
import jax.numpy as jnp
from jax.experimental import pallas as pl
from jax.experimental.pallas import tpu as pltpu


def encoder_block_kernel(x_ref, g1_ref, be1_ref, wqkv_ref, wo_ref, bo_ref,
                         g2_ref, be2_ref, w1_ref, bm1_ref, w2_ref, bm2_ref,
                         o_ref, *, num_heads, dim_head, eps):
    """One grid step = one batch element: LN1 -> MHA -> +res -> LN2 -> MLP -> +res."""
    x = x_ref[0].astype(jnp.float32)                     # [S, E]
    H, Dh = num_heads, dim_head
    HD = H * Dh

    # ---------------- LayerNorm 1 ----------------
    mu1 = jnp.mean(x, axis=-1, keepdims=True)
    xc1 = x - mu1
    var1 = jnp.mean(xc1 * xc1, axis=-1, keepdims=True)
    xn1 = xc1 * jax.lax.rsqrt(var1 + eps) * g1_ref[...] + be1_ref[...]   # [S, E]

    # ---------------- Multi-headed attention ----------------
    # Fused QKV projection: single [S,E] x [E,3*H*Dh] MXU pass for all heads.
    qkv = jnp.dot(xn1, wqkv_ref[...], preferred_element_type=jnp.float32)  # [S, 3*HD]

    # One-time repack of the fused result into a head-batched [H, S, Dh] layout
    # (static lane slices stacked along a new major axis).
    q = jnp.stack([qkv[:, h * Dh:(h + 1) * Dh] for h in range(H)], axis=0)
    k = jnp.stack([qkv[:, HD + h * Dh:HD + (h + 1) * Dh] for h in range(H)], axis=0)
    v = jnp.stack([qkv[:, 2 * HD + h * Dh:2 * HD + (h + 1) * Dh] for h in range(H)],
                  axis=0)                                                   # [H, S, Dh]

    # Head-batched scores: one batched matmul, contraction on Dh ('hqd,hkd->hqk').
    scale = 1.0 / (dim_head ** 0.5)
    s = jax.lax.dot_general(q, k, (((2,), (2,)), ((0,), (0,))),
                            preferred_element_type=jnp.float32) * scale    # [H, S, S]

    # Softmax once over the whole [H, S, S] slab.  Exact divide (no approx
    # reciprocal) so row probabilities sum to 1 within f32 rounding.
    s = s - jnp.max(s, axis=-1, keepdims=True)
    p = jnp.exp(s)
    p = p / jnp.sum(p, axis=-1, keepdims=True)

    # Head-batched context: 'hqk,hkd->hqd'.
    ctx = jax.lax.dot_general(p, v, (((2,), (1,)), ((0,), (0,))),
                              preferred_element_type=jnp.float32)           # [H, S, Dh]

    # Output projection batched over heads ('hsd,hde->hse'), reduced over the
    # major head axis — no concat / lane relayout, no per-head accumulator.
    attn_h = jax.lax.dot_general(ctx, wo_ref[...], (((2,), (1,)), ((0,), (0,))),
                                 preferred_element_type=jnp.float32)        # [H, S, E]
    attn = jnp.sum(attn_h, axis=0) + bo_ref[...]                            # [S, E]

    # residual 1 (dropout1 = identity in eval mode)
    x1 = x + attn

    # ---------------- LayerNorm 2 ----------------
    mu2 = jnp.mean(x1, axis=-1, keepdims=True)
    xc2 = x1 - mu2
    var2 = jnp.mean(xc2 * xc2, axis=-1, keepdims=True)
    xn2 = xc2 * jax.lax.rsqrt(var2 + eps) * g2_ref[...] + be2_ref[...]

    # ---------------- MLP: Linear -> GELU -> Linear ----------------
    h1 = jnp.dot(xn2, w1_ref[...], preferred_element_type=jnp.float32) + bm1_ref[...]
    h1 = jax.nn.gelu(h1, approximate=True)               # tanh GELU (see TODO)
    mlp = jnp.dot(h1, w2_ref[...], preferred_element_type=jnp.float32) + bm2_ref[...]

    # residual 2 (dropout2 = identity in eval mode)
    o_ref[0] = (x1 + mlp).astype(o_ref.dtype)


def prepare_encoder_weights(wq, wk, wv, wo, bo, g1, be1, g2, be2, w1, bm1, w2, bm2):
    """One-time (model-load-time) weight repacking; NOT in the per-call path.

    wq/wk/wv: [H,Dh,E]; wo: [E,H*Dh]; w1: [M,E]; w2: [E,M].
    """
    H, Dh, E = wq.shape
    HD = H * Dh
    M = w1.shape[0]
    wqkv_t = jnp.concatenate([wq.reshape(HD, E),
                              wk.reshape(HD, E),
                              wv.reshape(HD, E)], axis=0).T           # [E, 3*HD]
    wo_h = wo.T.reshape(H, Dh, E)                                      # [H, Dh, E]
    return dict(
        num_heads=H, dim_head=Dh, dim_embedding=E, dim_mlp=M,
        g1=g1.reshape(1, E), be1=be1.reshape(1, E),
        wqkv_t=wqkv_t, wo_h=wo_h, bo=bo.reshape(1, E),
        g2=g2.reshape(1, E), be2=be2.reshape(1, E),
        w1_t=w1.T, bm1=bm1.reshape(1, M), w2_t=w2.T, bm2=bm2.reshape(1, E),
    )


def encoder_block(x, params):
    """x: [B,S,E]; params: output of prepare_encoder_weights()."""
    B, S, E = x.shape
    H = params["num_heads"]
    Dh = params["dim_head"]
    HD = H * Dh
    M = params["dim_mlp"]

    kernel = functools.partial(encoder_block_kernel,
                               num_heads=H, dim_head=Dh, eps=1e-5)

    row_e = pl.BlockSpec((1, E), lambda b: (0, 0))
    row_m = pl.BlockSpec((1, M), lambda b: (0, 0))

    return pl.pallas_call(
        kernel,
        out_shape=jax.ShapeDtypeStruct((B, S, E), x.dtype),
        grid=(B,),
        in_specs=[
            pl.BlockSpec((1, S, E), lambda b: (b, 0, 0)),     # x: one batch slab
            row_e,                                            # gamma1
            row_e,                                            # beta1
            pl.BlockSpec((E, 3 * HD), lambda b: (0, 0)),      # W_qkv^T (fused)
            pl.BlockSpec((H, Dh, E), lambda b: (0, 0, 0)),    # W_o head-batched
            row_e,                                            # b_o
            row_e,                                            # gamma2
            row_e,                                            # beta2
            pl.BlockSpec((E, M), lambda b: (0, 0)),           # W1^T
            row_m,                                            # b1
            pl.BlockSpec((M, E), lambda b: (0, 0)),           # W2^T
            row_e,                                            # b2
        ],
        out_specs=pl.BlockSpec((1, S, E), lambda b: (b, 0, 0)),
        compiler_params=pltpu.CompilerParams(
            dimension_semantics=("parallel",)),               # 1 batch per TC on v7x
    )(x, params["g1"], params["be1"], params["wqkv_t"], params["wo_h"],
      params["bo"], params["g2"], params["be2"], params["w1_t"], params["bm1"],
      params["w2_t"], params["bm2"])


def reference_encoder_block(x, g1, be1, wq, wk, wv, wo, bo, g2, be2,
                            w1, bm1, w2, bm2, eps=1e-5):
    """Pure-JAX reference with identical (eval-mode) semantics."""
    def layernorm(y, g, b):
        mu = jnp.mean(y, axis=-1, keepdims=True)
        var = jnp.mean((y - mu) ** 2, axis=-1, keepdims=True)
        return (y - mu) / jnp.sqrt(var + eps) * g + b

    H, Dh, _ = wq.shape
    xn = layernorm(x, g1, be1)
    heads = []
    for h in range(H):
        q = xn @ wq[h].T
        k = xn @ wk[h].T
        v = xn @ wv[h].T
        s = (q @ jnp.swapaxes(k, -2, -1)) / (Dh ** 0.5)
        p = jax.nn.softmax(s, axis=-1)
        heads.append(p @ v)
    attn = jnp.concatenate(heads, axis=-1) @ wo.T + bo
    x = x + attn
    xn2 = layernorm(x, g2, be2)
    h1 = jax.nn.gelu(xn2 @ w1.T + bm1, approximate=True)
    return x + h1 @ w2.T + bm2


if __name__ == "__main__":
    B, S, E = 2, 8, 32          # batch, seq, dim_embedding
    H, Dh = 4, 8                # num_heads, dim_head
    M = 64                      # dim_mlp

    key = jax.random.PRNGKey(0)
    (kx, kq, kk, kv, kw, kb, kg1, kb1, kg2, kb2,
     k1w, k1b, k2w, k2b) = jax.random.split(key, 14)

    # PyTorch-like init: Linear ~ U(-1/sqrt(fan_in), 1/sqrt(fan_in)).
    bd_e = 1.0 / (E ** 0.5)
    bd_hd = 1.0 / ((H * Dh) ** 0.5)
    bd_m = 1.0 / (M ** 0.5)

    x = jax.random.normal(kx, (B, S, E), dtype=jnp.float32)
    wq = jax.random.uniform(kq, (H, Dh, E), jnp.float32, -bd_e, bd_e)
    wk = jax.random.uniform(kk, (H, Dh, E), jnp.float32, -bd_e, bd_e)
    wv = jax.random.uniform(kv, (H, Dh, E), jnp.float32, -bd_e, bd_e)
    wo = jax.random.uniform(kw, (E, H * Dh), jnp.float32, -bd_hd, bd_hd)
    bo = jax.random.uniform(kb, (E,), jnp.float32, -bd_hd, bd_hd)
    g1 = jax.random.uniform(kg1, (E,), jnp.float32, 0.5, 1.5)
    be1 = jax.random.uniform(kb1, (E,), jnp.float32, -0.1, 0.1)
    g2 = jax.random.uniform(kg2, (E,), jnp.float32, 0.5, 1.5)
    be2 = jax.random.uniform(kb2, (E,), jnp.float32, -0.1, 0.1)
    w1 = jax.random.uniform(k1w, (M, E), jnp.float32, -bd_e, bd_e)
    bm1 = jax.random.uniform(k1b, (M,), jnp.float32, -bd_e, bd_e)
    w2 = jax.random.uniform(k2w, (E, M), jnp.float32, -bd_m, bd_m)
    bm2 = jax.random.uniform(k2b, (E,), jnp.float32, -bd_m, bd_m)

    # One-time weight repacking (model-load-time), then the kernel call.
    params = prepare_encoder_weights(wq, wk, wv, wo, bo, g1, be1, g2, be2,
                                     w1, bm1, w2, bm2)
    out = encoder_block(x, params)
    out = jax.block_until_ready(out)

    ref = reference_encoder_block(x, g1, be1, wq, wk, wv, wo, bo, g2, be2,
                                  w1, bm1, w2, bm2)
    assert out.shape == (B, S, E)
    assert jnp.allclose(out, ref, atol=1e-4, rtol=1e-4), (
        float(jnp.max(jnp.abs(out - ref))))

    print("KERNEL_OK")
</pallas_src>

<mosaic_0001>
module attributes {stable_mosaic.version = 11 : i64} {
  func.func @encoder_block_kernel(%arg0: i32, %arg1: memref<1x8x32xf32, #tpu.memory_space<vmem>>, %arg2: memref<1x32xf32, #tpu.memory_space<vmem>>, %arg3: memref<1x32xf32, #tpu.memory_space<vmem>>, %arg4: memref<32x96xf32, #tpu.memory_space<vmem>>, %arg5: memref<4x8x32xf32, #tpu.memory_space<vmem>>, %arg6: memref<1x32xf32, #tpu.memory_space<vmem>>, %arg7: memref<1x32xf32, #tpu.memory_space<vmem>>, %arg8: memref<1x32xf32, #tpu.memory_space<vmem>>, %arg9: memref<32x64xf32, #tpu.memory_space<vmem>>, %arg10: memref<1x64xf32, #tpu.memory_space<vmem>>, %arg11: memref<64x32xf32, #tpu.memory_space<vmem>>, %arg12: memref<1x32xf32, #tpu.memory_space<vmem>>, %arg13: memref<1x8x32xf32, #tpu.memory_space<vmem>>) attributes {dimension_semantics = [#tpu.dimension_semantics<parallel>], iteration_bounds = array<i64: 2>, scalar_prefetch = 0 : i64, scratch_operands = 0 : i64, tpu.core_type = #tpu.core_type<tc>, window_params = [{transform_indices = @transform_0, window_bounds = array<i64: 1, 8, 32>}, {pipeline_mode = #tpu.pipeline_mode<synchronous>, transform_indices = @transform_1, window_bounds = array<i64: 1, 32>}, {pipeline_mode = #tpu.pipeline_mode<synchronous>, transform_indices = @transform_2, window_bounds = array<i64: 1, 32>}, {pipeline_mode = #tpu.pipeline_mode<synchronous>, transform_indices = @transform_3, window_bounds = array<i64: 32, 96>}, {pipeline_mode = #tpu.pipeline_mode<synchronous>, transform_indices = @transform_4, window_bounds = array<i64: 4, 8, 32>}, {pipeline_mode = #tpu.pipeline_mode<synchronous>, transform_indices = @transform_5, window_bounds = array<i64: 1, 32>}, {pipeline_mode = #tpu.pipeline_mode<synchronous>, transform_indices = @transform_6, window_bounds = array<i64: 1, 32>}, {pipeline_mode = #tpu.pipeline_mode<synchronous>, transform_indices = @transform_7, window_bounds = array<i64: 1, 32>}, {pipeline_mode = #tpu.pipeline_mode<synchronous>, transform_indices = @transform_8, window_bounds = array<i64: 32, 64>}, {pipeline_mode = #tpu.pipeline_mode<synchronous>, transform_indices = @transform_9, window_bounds = array<i64: 1, 64>}, {pipeline_mode = #tpu.pipeline_mode<synchronous>, transform_indices = @transform_10, window_bounds = array<i64: 64, 32>}, {pipeline_mode = #tpu.pipeline_mode<synchronous>, transform_indices = @transform_11, window_bounds = array<i64: 1, 32>}, {transform_indices = @transform_12, window_bounds = array<i64: 1, 8, 32>}]} {
    %c0 = arith.constant 0 : index
    %c0_0 = arith.constant 0 : index
    %c0_1 = arith.constant 0 : index
    %0 = vector.load %arg1[%c0, %c0_0, %c0_1] : memref<1x8x32xf32, #tpu.memory_space<vmem>>, vector<1x8x32xf32>
    %1 = vector.shape_cast %0 : vector<1x8x32xf32> to vector<8x32xf32>
    %cst = arith.constant dense<0.000000e+00> : vector<8xf32>
    %2 = vector.multi_reduction <add>, %1, %cst [1] : vector<8x32xf32> to vector<8xf32>
    %3 = vector.shape_cast %2 : vector<8xf32> to vector<8x1xf32>
    %cst_2 = arith.constant 3.200000e+01 : f32
    %4 = vector.broadcast %cst_2 : f32 to vector<8x1xf32>
    %5 = arith.divf %3, %4 : vector<8x1xf32>
    %6 = vector.broadcast %5 : vector<8x1xf32> to vector<8x32xf32>
    %7 = arith.subf %1, %6 : vector<8x32xf32>
    %8 = arith.mulf %7, %7 : vector<8x32xf32>
    %cst_3 = arith.constant dense<0.000000e+00> : vector<8xf32>
    %9 = vector.multi_reduction <add>, %8, %cst_3 [1] : vector<8x32xf32> to vector<8xf32>
    %10 = vector.shape_cast %9 : vector<8xf32> to vector<8x1xf32>
    %cst_4 = arith.constant 3.200000e+01 : f32
    %11 = vector.broadcast %cst_4 : f32 to vector<8x1xf32>
    %12 = arith.divf %10, %11 : vector<8x1xf32>
    %cst_5 = arith.constant 9.99999974E-6 : f32
    %13 = vector.broadcast %cst_5 : f32 to vector<8x1xf32>
    %14 = arith.addf %12, %13 : vector<8x1xf32>
    %15 = math.rsqrt %14 : vector<8x1xf32>
    %16 = vector.broadcast %15 : vector<8x1xf32> to vector<8x32xf32>
    %17 = arith.mulf %7, %16 : vector<8x32xf32>
    %c0_6 = arith.constant 0 : index
    %c0_7 = arith.constant 0 : index
    %18 = vector.load %arg2[%c0_6, %c0_7] : memref<1x32xf32, #tpu.memory_space<vmem>>, vector<1x32xf32>
    %19 = vector.broadcast %18 : vector<1x32xf32> to vector<8x32xf32>
    %20 = arith.mulf %17, %19 : vector<8x32xf32>
    %c0_8 = arith.constant 0 : index
    %c0_9 = arith.constant 0 : index
    %21 = vector.load %arg3[%c0_8, %c0_9] : memref<1x32xf32, #tpu.memory_space<vmem>>, vector<1x32xf32>
    %22 = vector.broadcast %21 : vector<1x32xf32> to vector<8x32xf32>
    %23 = arith.addf %20, %22 : vector<8x32xf32>
    %c0_10 = arith.constant 0 : index
    %c0_11 = arith.constant 0 : index
    %24 = vector.load %arg4[%c0_10, %c0_11] : memref<32x96xf32, #tpu.memory_space<vmem>>, vector<32x96xf32>
    %cst_12 = arith.constant dense<0.000000e+00> : vector<8x96xf32>
    %25 = tpu.matmul %23, %24, %cst_12 {dimension_numbers = #tpu.dot_dimension_numbers<[1], [0], [0], [1], [0, 0, 1, 1], [], []>} : vector<8x32xf32>, vector<32x96xf32>, vector<8x96xf32> -> vector<8x96xf32>
    %26 = vector.extract_strided_slice %25 {offsets = [0, 0], sizes = [8, 8], strides = [1, 1]} : vector<8x96xf32> to vector<8x8xf32>
    %27 = vector.extract_strided_slice %25 {offsets = [0, 8], sizes = [8, 8], strides = [1, 1]} : vector<8x96xf32> to vector<8x8xf32>
    %28 = vector.extract_strided_slice %25 {offsets = [0, 16], sizes = [8, 8], strides = [1, 1]} : vector<8x96xf32> to vector<8x8xf32>
    %29 = vector.extract_strided_slice %25 {offsets = [0, 24], sizes = [8, 8], strides = [1, 1]} : vector<8x96xf32> to vector<8x8xf32>
    %30 = vector.shape_cast %26 : vector<8x8xf32> to vector<1x8x8xf32>
    %31 = vector.shape_cast %27 : vector<8x8xf32> to vector<1x8x8xf32>
    %32 = vector.shape_cast %28 : vector<8x8xf32> to vector<1x8x8xf32>
    %33 = vector.shape_cast %29 : vector<8x8xf32> to vector<1x8x8xf32>
    %34 = tpu.concatenate %30, %31, %32, %33 in 0 : vector<1x8x8xf32>, vector<1x8x8xf32>, vector<1x8x8xf32>, vector<1x8x8xf32> -> vector<4x8x8xf32>
    %35 = vector.extract_strided_slice %25 {offsets = [0, 32], sizes = [8, 8], strides = [1, 1]} : vector<8x96xf32> to vector<8x8xf32>
    %36 = vector.extract_strided_slice %25 {offsets = [0, 40], sizes = [8, 8], strides = [1, 1]} : vector<8x96xf32> to vector<8x8xf32>
    %37 = vector.extract_strided_slice %25 {offsets = [0, 48], sizes = [8, 8], strides = [1, 1]} : vector<8x96xf32> to vector<8x8xf32>
    %38 = vector.extract_strided_slice %25 {offsets = [0, 56], sizes = [8, 8], strides = [1, 1]} : vector<8x96xf32> to vector<8x8xf32>
    %39 = vector.shape_cast %35 : vector<8x8xf32> to vector<1x8x8xf32>
    %40 = vector.shape_cast %36 : vector<8x8xf32> to vector<1x8x8xf32>
    %41 = vector.shape_cast %37 : vector<8x8xf32> to vector<1x8x8xf32>
    %42 = vector.shape_cast %38 : vector<8x8xf32> to vector<1x8x8xf32>
    %43 = tpu.concatenate %39, %40, %41, %42 in 0 : vector<1x8x8xf32>, vector<1x8x8xf32>, vector<1x8x8xf32>, vector<1x8x8xf32> -> vector<4x8x8xf32>
    %44 = vector.extract_strided_slice %25 {offsets = [0, 64], sizes = [8, 8], strides = [1, 1]} : vector<8x96xf32> to vector<8x8xf32>
    %45 = vector.extract_strided_slice %25 {offsets = [0, 72], sizes = [8, 8], strides = [1, 1]} : vector<8x96xf32> to vector<8x8xf32>
    %46 = vector.extract_strided_slice %25 {offsets = [0, 80], sizes = [8, 8], strides = [1, 1]} : vector<8x96xf32> to vector<8x8xf32>
    %47 = vector.extract_strided_slice %25 {offsets = [0, 88], sizes = [8, 8], strides = [1, 1]} : vector<8x96xf32> to vector<8x8xf32>
    %48 = vector.shape_cast %44 : vector<8x8xf32> to vector<1x8x8xf32>
    %49 = vector.shape_cast %45 : vector<8x8xf32> to vector<1x8x8xf32>
    %50 = vector.shape_cast %46 : vector<8x8xf32> to vector<1x8x8xf32>
    %51 = vector.shape_cast %47 : vector<8x8xf32> to vector<1x8x8xf32>
    %52 = tpu.concatenate %48, %49, %50, %51 in 0 : vector<1x8x8xf32>, vector<1x8x8xf32>, vector<1x8x8xf32>, vector<1x8x8xf32> -> vector<4x8x8xf32>
    %cst_13 = arith.constant dense<0.000000e+00> : vector<4x8x8xf32>
    %53 = tpu.matmul %34, %43, %cst_13 {dimension_numbers = #tpu.dot_dimension_numbers<[2], [2], [1], [1], [0, 0, 0, 1, 1, 1], [0], [0]>} : vector<4x8x8xf32>, vector<4x8x8xf32>, vector<4x8x8xf32> -> vector<4x8x8xf32>
    %cst_14 = arith.constant 0.353553385 : f32
    %54 = vector.broadcast %cst_14 : f32 to vector<4x8x8xf32>
    %55 = arith.mulf %53, %54 : vector<4x8x8xf32>
    %cst_15 = arith.constant dense<0xFF800000> : vector<4x8xf32>
    %56 = vector.multi_reduction <maximumf>, %55, %cst_15 [2] : vector<4x8x8xf32> to vector<4x8xf32>
    %57 = vector.shape_cast %56 : vector<4x8xf32> to vector<4x8x1xf32>
    %58 = vector.broadcast %57 : vector<4x8x1xf32> to vector<4x8x8xf32>
    %59 = arith.subf %55, %58 : vector<4x8x8xf32>
    %60 = math.exp %59 : vector<4x8x8xf32>
    %cst_16 = arith.constant dense<0.000000e+00> : vector<4x8xf32>
    %61 = vector.multi_reduction <add>, %60, %cst_16 [2] : vector<4x8x8xf32> to vector<4x8xf32>
    %62 = vector.shape_cast %61 : vector<4x8xf32> to vector<4x8x1xf32>
    %63 = vector.broadcast %62 : vector<4x8x1xf32> to vector<4x8x8xf32>
    %64 = arith.divf %60, %63 : vector<4x8x8xf32>
    %cst_17 = arith.constant dense<0.000000e+00> : vector<4x8x8xf32>
    %65 = tpu.matmul %64, %52, %cst_17 {dimension_numbers = #tpu.dot_dimension_numbers<[2], [1], [1], [2], [0, 0, 0, 1, 1, 2], [0], [0]>} : vector<4x8x8xf32>, vector<4x8x8xf32>, vector<4x8x8xf32> -> vector<4x8x8xf32>
    %c0_18 = arith.constant 0 : index
    %c0_19 = arith.constant 0 : index
    %c0_20 = arith.constant 0 : index
    %66 = vector.load %arg5[%c0_18, %c0_19, %c0_20] : memref<4x8x32xf32, #tpu.memory_space<vmem>>, vector<4x8x32xf32>
    %cst_21 = arith.constant dense<0.000000e+00> : vector<4x8x32xf32>
    %67 = tpu.matmul %65, %66, %cst_21 {dimension_numbers = #tpu.dot_dimension_numbers<[2], [1], [1], [2], [0, 0, 0, 1, 1, 2], [0], [0]>} : vector<4x8x8xf32>, vector<4x8x32xf32>, vector<4x8x32xf32> -> vector<4x8x32xf32>
    %cst_22 = arith.constant dense<0.000000e+00> : vector<8x32xf32>
    %68 = vector.multi_reduction <add>, %67, %cst_22 [0] : vector<4x8x32xf32> to vector<8x32xf32>
    %c0_23 = arith.constant 0 : index
    %c0_24 = arith.constant 0 : index
    %69 = vector.load %arg6[%c0_23, %c0_24] : memref<1x32xf32, #tpu.memory_space<vmem>>, vector<1x32xf32>
    %70 = vector.broadcast %69 : vector<1x32xf32> to vector<8x32xf32>
    %71 = arith.addf %68, %70 : vector<8x32xf32>
    %72 = arith.addf %1, %71 : vector<8x32xf32>
    %cst_25 = arith.constant dense<0.000000e+00> : vector<8xf32>
    %73 = vector.multi_reduction <add>, %72, %cst_25 [1] : vector<8x32xf32> to vector<8xf32>
    %74 = vector.shape_cast %73 : vector<8xf32> to vector<8x1xf32>
    %cst_26 = arith.constant 3.200000e+01 : f32
    %75 = vector.broadcast %cst_26 : f32 to vector<8x1xf32>
    %76 = arith.divf %74, %75 : vector<8x1xf32>
    %77 = vector.broadcast %76 : vector<8x1xf32> to vector<8x32xf32>
    %78 = arith.subf %72, %77 : vector<8x32xf32>
    %79 = arith.mulf %78, %78 : vector<8x32xf32>
    %cst_27 = arith.constant dense<0.000000e+00> : vector<8xf32>
    %80 = vector.multi_reduction <add>, %79, %cst_27 [1] : vector<8x32xf32> to vector<8xf32>
    %81 = vector.shape_cast %80 : vector<8xf32> to vector<8x1xf32>
    %cst_28 = arith.constant 3.200000e+01 : f32
    %82 = vector.broadcast %cst_28 : f32 to vector<8x1xf32>
    %83 = arith.divf %81, %82 : vector<8x1xf32>
    %cst_29 = arith.constant 9.99999974E-6 : f32
    %84 = vector.broadcast %cst_29 : f32 to vector<8x1xf32>
    %85 = arith.addf %83, %84 : vector<8x1xf32>
    %86 = math.rsqrt %85 : vector<8x1xf32>
    %87 = vector.broadcast %86 : vector<8x1xf32> to vector<8x32xf32>
    %88 = arith.mulf %78, %87 : vector<8x32xf32>
    %c0_30 = arith.constant 0 : index
    %c0_31 = arith.constant 0 : index
    %89 = vector.load %arg7[%c0_30, %c0_31] : memref<1x32xf32, #tpu.memory_space<vmem>>, vector<1x32xf32>
    %90 = vector.broadcast %89 : vector<1x32xf32> to vector<8x32xf32>
    %91 = arith.mulf %88, %90 : vector<8x32xf32>
    %c0_32 = arith.constant 0 : index
    %c0_33 = arith.constant 0 : index
    %92 = vector.load %arg8[%c0_32, %c0_33] : memref<1x32xf32, #tpu.memory_space<vmem>>, vector<1x32xf32>
    %93 = vector.broadcast %92 : vector<1x32xf32> to vector<8x32xf32>
    %94 = arith.addf %91, %93 : vector<8x32xf32>
    %c0_34 = arith.constant 0 : index
    %c0_35 = arith.constant 0 : index
    %95 = vector.load %arg9[%c0_34, %c0_35] : memref<32x64xf32, #tpu.memory_space<vmem>>, vector<32x64xf32>
    %cst_36 = arith.constant dense<0.000000e+00> : vector<8x64xf32>
    %96 = tpu.matmul %94, %95, %cst_36 {dimension_numbers = #tpu.dot_dimension_numbers<[1], [0], [0], [1], [0, 0, 1, 1], [], []>} : vector<8x32xf32>, vector<32x64xf32>, vector<8x64xf32> -> vector<8x64xf32>
    %c0_37 = arith.constant 0 : index
    %c0_38 = arith.constant 0 : index
    %97 = vector.load %arg10[%c0_37, %c0_38] : memref<1x64xf32, #tpu.memory_space<vmem>>, vector<1x64xf32>
    %98 = vector.broadcast %97 : vector<1x64xf32> to vector<8x64xf32>
    %99 = arith.addf %96, %98 : vector<8x64xf32>
    %100 = arith.mulf %99, %99 : vector<8x64xf32>
    %101 = arith.mulf %99, %100 : vector<8x64xf32>
    %cst_39 = arith.constant 4.471500e-02 : f32
    %102 = vector.broadcast %cst_39 : f32 to vector<8x64xf32>
    %103 = arith.mulf %102, %101 : vector<8x64xf32>
    %104 = arith.addf %99, %103 : vector<8x64xf32>
    %cst_40 = arith.constant 0.797884583 : f32
    %105 = vector.broadcast %cst_40 : f32 to vector<8x64xf32>
    %106 = arith.mulf %105, %104 : vector<8x64xf32>
    %107 = math.tanh %106 : vector<8x64xf32>
    %cst_41 = arith.constant 1.000000e+00 : f32
    %108 = vector.broadcast %cst_41 : f32 to vector<8x64xf32>
    %109 = arith.addf %108, %107 : vector<8x64xf32>
    %cst_42 = arith.constant 5.000000e-01 : f32
    %110 = vector.broadcast %cst_42 : f32 to vector<8x64xf32>
    %111 = arith.mulf %110, %109 : vector<8x64xf32>
    %112 = arith.mulf %99, %111 : vector<8x64xf32>
    %c0_43 = arith.constant 0 : index
    %c0_44 = arith.constant 0 : index
    %113 = vector.load %arg11[%c0_43, %c0_44] : memref<64x32xf32, #tpu.memory_space<vmem>>, vector<64x32xf32>
    %cst_45 = arith.constant dense<0.000000e+00> : vector<8x32xf32>
    %114 = tpu.matmul %112, %113, %cst_45 {dimension_numbers = #tpu.dot_dimension_numbers<[1], [0], [0], [1], [0, 0, 1, 1], [], []>} : vector<8x64xf32>, vector<64x32xf32>, vector<8x32xf32> -> vector<8x32xf32>
    %c0_46 = arith.constant 0 : index
    %c0_47 = arith.constant 0 : index
    %115 = vector.load %arg12[%c0_46, %c0_47] : memref<1x32xf32, #tpu.memory_space<vmem>>, vector<1x32xf32>
    %116 = vector.broadcast %115 : vector<1x32xf32> to vector<8x32xf32>
    %117 = arith.addf %114, %116 : vector<8x32xf32>
    %118 = arith.addf %72, %117 : vector<8x32xf32>
    %c0_48 = arith.constant 0 : index
    %c0_49 = arith.constant 0 : index
    %c0_50 = arith.constant 0 : index
    %119 = vector.load %arg13[%c0_48, %c0_49, %c0_50] : memref<1x8x32xf32, #tpu.memory_space<vmem>>, vector<1x8x32xf32>
    %120 = vector.shape_cast %119 : vector<1x8x32xf32> to vector<8x32xf32>
    %121 = vector.shape_cast %118 : vector<8x32xf32> to vector<1x8x32xf32>
    tpu.vector_store %arg13[%c0_48, %c0_49, %c0_50], %121 {strides = array<i32>} : memref<1x8x32xf32, #tpu.memory_space<vmem>>, vector<1x8x32xf32>,
    return
  }
  func.func @transform_0(%arg0: i32) -> (i32, i32, i32) {
    %c0_i32 = arith.constant 0 : i32
    %c0_i32_0 = arith.constant 0 : i32
    %c0_i32_1 = arith.constant 0 : i32
    return %arg0, %c0_i32, %c0_i32_0 : i32, i32, i32
  }
  func.func @transform_1(%arg0: i32) -> (i32, i32) {
    %c0_i32 = arith.constant 0 : i32
    %c0_i32_0 = arith.constant 0 : i32
    %c0_i32_1 = arith.constant 0 : i32
    return %c0_i32, %c0_i32_0 : i32, i32
  }
  func.func @transform_2(%arg0: i32) -> (i32, i32) {
    %c0_i32 = arith.constant 0 : i32
    %c0_i32_0 = arith.constant 0 : i32
    %c0_i32_1 = arith.constant 0 : i32
    return %c0_i32, %c0_i32_0 : i32, i32
  }
  func.func @transform_3(%arg0: i32) -> (i32, i32) {
    %c0_i32 = arith.constant 0 : i32
    %c0_i32_0 = arith.constant 0 : i32
    %c0_i32_1 = arith.constant 0 : i32
    return %c0_i32, %c0_i32_0 : i32, i32
  }
  func.func @transform_4(%arg0: i32) -> (i32, i32, i32) {
    %c0_i32 = arith.constant 0 : i32
    %c0_i32_0 = arith.constant 0 : i32
    %c0_i32_1 = arith.constant 0 : i32
    %c0_i32_2 = arith.constant 0 : i32
    return %c0_i32, %c0_i32_0, %c0_i32_1 : i32, i32, i32
  }
  func.func @transform_5(%arg0: i32) -> (i32, i32) {
    %c0_i32 = arith.constant 0 : i32
    %c0_i32_0 = arith.constant 0 : i32
    %c0_i32_1 = arith.constant 0 : i32
    return %c0_i32, %c0_i32_0 : i32, i32
  }
  func.func @transform_6(%arg0: i32) -> (i32, i32) {
    %c0_i32 = arith.constant 0 : i32
    %c0_i32_0 = arith.constant 0 : i32
    %c0_i32_1 = arith.constant 0 : i32
    return %c0_i32, %c0_i32_0 : i32, i32
  }
  func.func @transform_7(%arg0: i32) -> (i32, i32) {
    %c0_i32 = arith.constant 0 : i32
    %c0_i32_0 = arith.constant 0 : i32
    %c0_i32_1 = arith.constant 0 : i32
    return %c0_i32, %c0_i32_0 : i32, i32
  }
  func.func @transform_8(%arg0: i32) -> (i32, i32) {
    %c0_i32 = arith.constant 0 : i32
    %c0_i32_0 = arith.constant 0 : i32
    %c0_i32_1 = arith.constant 0 : i32
    return %c0_i32, %c0_i32_0 : i32, i32
  }
  func.func @transform_9(%arg0: i32) -> (i32, i32) {
    %c0_i32 = arith.constant 0 : i32
    %c0_i32_0 = arith.constant 0 : i32
    %c0_i32_1 = arith.constant 0 : i32
    return %c0_i32, %c0_i32_0 : i32, i32
  }
  func.func @transform_10(%arg0: i32) -> (i32, i32) {
    %c0_i32 = arith.constant 0 : i32
    %c0_i32_0 = arith.constant 0 : i32
    %c0_i32_1 = arith.constant 0 : i32
    return %c0_i32, %c0_i32_0 : i32, i32
  }
  func.func @transform_11(%arg0: i32) -> (i32, i32) {
    %c0_i32 = arith.constant 0 : i32
    %c0_i32_0 = arith.constant 0 : i32
    %c0_i32_1 = arith.constant 0 : i32
    return %c0_i32, %c0_i32_0 : i32, i32
  }
  func.func @transform_12(%arg0: i32) -> (i32, i32, i32) {
    %c0_i32 = arith.constant 0 : i32
    %c0_i32_0 = arith.constant 0 : i32
    %c0_i32_1 = arith.constant 0 : i32
    return %arg0, %c0_i32, %c0_i32_0 : i32, i32, i32
  }
}

</mosaic_0001>

<llo_original>
// kernel: tpu_custom_call.1
$region0: #{tpu_custom_call.1}
  #allocation0 [shape = 'u32[]', space=smem, size = 0x4, offset = 0x4, fixed_abs, tag = 'smem constant byte address 0x4 - core index']
  #allocation1 [shape = 'u32[144,128]{1,0:T(1,128)}', space=vmem, size = 0x12000, scoped, tag = 'internal scratch']
  %s0 = inlined_call_operand.hbm [shape: f32[2,8,32], index: 0, kind: input, shape index: {}]
  %s1 = inlined_call_operand.vmem [shape: f32[1,32], index: 1, kind: input, shape index: {}]
  %s2 = inlined_call_operand.vmem [shape: f32[1,32], index: 2, kind: input, shape index: {}]
  %s3 = inlined_call_operand.vmem [shape: f32[32,96], index: 3, kind: input, shape index: {}]
  %s4 = inlined_call_operand.vmem [shape: f32[4,8,32], index: 4, kind: input, shape index: {}]
  %s5 = inlined_call_operand.vmem [shape: f32[1,32], index: 5, kind: input, shape index: {}]
  %s6 = inlined_call_operand.vmem [shape: f32[1,32], index: 6, kind: input, shape index: {}]
  %s7 = inlined_call_operand.vmem [shape: f32[1,32], index: 7, kind: input, shape index: {}]
  %s8 = inlined_call_operand.vmem [shape: f32[32,64], index: 8, kind: input, shape index: {}]
  %s9 = inlined_call_operand.hbm [shape: f32[1,64], index: 9, kind: input, shape index: {}]
  %s10 = inlined_call_operand.vmem [shape: f32[64,32], index: 10, kind: input, shape index: {}]
  %s11 = inlined_call_operand.vmem [shape: f32[1,32], index: 11, kind: input, shape index: {}]
  %s12 = inlined_call_operand.hbm [shape: f32[2,8,32], index: 12, kind: output, shape index: {}]
  %s13 = sld [smem:[#allocation0]]
  $region89: #{tpu_custom_call.1} parent=0
    _
  %s15 = ssub.s32 1, %s13
  %s16 = scalar_select 0, %s15, %s13
  $region1: #{tpu_custom_call.1} parent=0
    #allocation2 [shape = 'u8[8192]{0}', space=vmem, size = 0x2000, scoped, tag = 'input window, operand 0']
    #allocation3 [shape = 's32[2]{0}', space=sflag, size = 0x8, scoped, tag = 'scoped memory for tpu_custom_call.1']
    #allocation4 [shape = 's32[2]{0}', space=sflag, size = 0x8, scoped, tag = 'scoped memory for tpu_custom_call.1']
    #allocation5 [shape = 'u8[512]{0}', space=vmem, size = 0x400, scoped, tag = 'input window, operand 9, single buffered']
    #allocation6 [shape = 's32[1]{0}', space=sflag, size = 0x4, scoped, tag = 'scoped memory for tpu_custom_call.1']
    #allocation7 [shape = 'u8[8192]{0}', space=vmem, size = 0x2000, scoped, tag = 'output window, operand 0']
    %17 = vsyncpa [#allocation3], 0
    %s18 = scalar_lea.sflag [#allocation3], 1
    %19 = vsyncpa %s18, 0
    %20 = vsyncpa [#allocation6], 0
    %21 = vsyncpa [#allocation4], 0
    %s22 = scalar_lea.sflag [#allocation4], 1
    %23 = vsyncpa %s22, 0
    loop: start=0, step=1, limit=4
    $region2: #{tpu_custom_call.1} parent=1 // loop_pre_header
      _
    $region3: #{tpu_custom_call.1} parent=1 // loop_header
      %s25 = sphi 0, %s29
      %p26 = scmp.ge.s32.totalorder %s25, 4
      %s35 = sphi 0, %s37
      %s38 = sphi 0, %s35
      %s39 = sphi 0, %s38
      %s55 = sphi 0, %s39
      %s59 = sphi 0, %s59
      %s61 = sphi 0, %s59
      %s62 = sphi 0, %s61
      %s76 = sphi 0, %s62
      %s80 = sphi 0, %s80
      %s82 = sphi 0, %s80
      %s83 = sphi 0, %s82
      %s97 = sphi 0, %s83
      %s101 = sphi 0, %s101
      %s103 = sphi 0, %s101
      %s104 = sphi 0, %s103
      %s118 = sphi 0, %s104
      %s122 = sphi 0, %s122
      %s124 = sphi 0, %s122
      %s125 = sphi 0, %s124
      %s139 = sphi 0, %s125
      %s143 = sphi 0, %s143
      %s145 = sphi 0, %s143
      %s146 = sphi 0, %s145
      %s160 = sphi 0, %s146
      %s164 = sphi 0, %s164
      %s166 = sphi 0, %s164
      %s167 = sphi 0, %s166
      %s181 = sphi 0, %s167
      %s185 = sphi 0, %s185
      %s187 = sphi 0, %s185
      %s188 = sphi 0, %s187
      %s202 = sphi 0, %s188
      %s206 = sphi 0, %s206
      %s208 = sphi 0, %s206
      %s209 = sphi 0, %s208
      %s223 = sphi 0, %s209
      %s227 = sphi 0, %s227
      %s229 = sphi 0, %s227
      %s230 = sphi 0, %s229
      %s244 = sphi 0, %s230
      %s248 = sphi 0, %s248
      %s250 = sphi 0, %s248
      %s251 = sphi 0, %s250
      %s265 = sphi 0, %s251
      %s269 = sphi 0, %s269
      %s271 = sphi 0, %s269
      %s272 = sphi 0, %s271
      %s286 = sphi 0, %s272
      %s292 = sphi 0, %s294
      %s295 = sphi 0, %s292
      %s296 = sphi 0, %s295
      %s312 = sphi 0, %s296
    $region4: #{tpu_custom_call.1} parent=1 // loop_header_branch
      %28 = sbr.rel (%p26) target = $region8
    $region5: #{tpu_custom_call.1} parent=1 // loop_body
      %s30 = ssub.s32 %s25, 1
      %s31 = ssub.s32 %s25, 2
      %s32 = sadd.s32 %s25, 1
      %s33 = ssub.s32 %s25, %s32
      %p34 = scmp.eq.s32.totalorder %s33, 0
      %s36 = sadd.s32 %s35, 1
      %s37 = scalar_select %p34, %s35, %s36
      %p40 = pneg %p34
      %p41 = scmp.eq.s32.totalorder %s25, 1
      %p42 = por %p40, %p41
      %p43 = scmp.ne.s32.totalorder %s35, %s38
      %p44 = scmp.eq.s32.totalorder %s25, 0
      %p45 = por %p43, %p44
      %p46 = scmp.ne.s32.totalorder %s35, %s38
      %p47 = scmp.eq.s32.totalorder %s30, 1
      %p48 = por %p46, %p47
      %p49 = scmp.ne.s32.totalorder %s38, %s39
      %p50 = scmp.eq.s32.totalorder %s30, 0
      %p51 = por %p49, %p50
      %p52 = scmp.ne.s32.totalorder %s38, %s39
      %p53 = scmp.eq.s32.totalorder %s31, 1
      %p54 = por %p52, %p53
      %p56 = scmp.ne.s32.totalorder %s39, %s55
      %p57 = scmp.eq.s32.totalorder %s31, 0
      %p58 = por %p56, %p57
      %s60 = sadd.s32 %s59, 1
      %p63 = scmp.eq.s32.totalorder %s25, 1
      %p64 = scmp.ne.s32.totalorder %s59, %s61
      %p65 = scmp.eq.s32.totalorder %s25, 0
      %p66 = por %p64, %p65
      %p67 = scmp.ne.s32.totalorder %s59, %s61
      %p68 = scmp.eq.s32.totalorder %s30, 1
      %p69 = por %p67, %p68
      %p70 = scmp.ne.s32.totalorder %s61, %s62
      %p71 = scmp.eq.s32.totalorder %s30, 0
      %p72 = por %p70, %p71
      %p73 = scmp.ne.s32.totalorder %s61, %s62
      %p74 = scmp.eq.s32.totalorder %s31, 1
      %p75 = por %p73, %p74
      %p77 = scmp.ne.s32.totalorder %s62, %s76
      %p78 = scmp.eq.s32.totalorder %s31, 0
      %p79 = por %p77, %p78
      %s81 = sadd.s32 %s80, 1
      %p84 = scmp.eq.s32.totalorder %s25, 1
      %p85 = scmp.ne.s32.totalorder %s80, %s82
      %p86 = scmp.eq.s32.totalorder %s25, 0
      %p87 = por %p85, %p86
      %p88 = scmp.ne.s32.totalorder %s80, %s82
      %p89 = scmp.eq.s32.totalorder %s30, 1
      %p90 = por %p88, %p89
      %p91 = scmp.ne.s32.totalorder %s82, %s83
      %p92 = scmp.eq.s32.totalorder %s30, 0
      %p93 = por %p91, %p92
      %p94 = scmp.ne.s32.totalorder %s82, %s83
      %p95 = scmp.eq.s32.totalorder %s31, 1
      %p96 = por %p94, %p95
      %p98 = scmp.ne.s32.totalorder %s83, %s97
      %p99 = scmp.eq.s32.totalorder %s31, 0
      %p100 = por %p98, %p99
      %s102 = sadd.s32 %s101, 1
      %p105 = scmp.eq.s32.totalorder %s25, 1
      %p106 = scmp.ne.s32.totalorder %s101, %s103
      %p107 = scmp.eq.s32.totalorder %s25, 0
      %p108 = por %p106, %p107
      %p109 = scmp.ne.s32.totalorder %s101, %s103
      %p110 = scmp.eq.s32.totalorder %s30, 1
      %p111 = por %p109, %p110
      %p112 = scmp.ne.s32.totalorder %s103, %s104
      %p113 = scmp.eq.s32.totalorder %s30, 0
      %p114 = por %p112, %p113
      %p115 = scmp.ne.s32.totalorder %s103, %s104
      %p116 = scmp.eq.s32.totalorder %s31, 1
      %p117 = por %p115, %p116
      %p119 = scmp.ne.s32.totalorder %s104, %s118
      %p120 = scmp.eq.s32.totalorder %s31, 0
      %p121 = por %p119, %p120
      %s123 = sadd.s32 %s122, 1
      %p126 = scmp.eq.s32.totalorder %s25, 1
      %p127 = scmp.ne.s32.totalorder %s122, %s124
      %p128 = scmp.eq.s32.totalorder %s25, 0
      %p129 = por %p127, %p128
      %p130 = scmp.ne.s32.totalorder %s122, %s124
      %p131 = scmp.eq.s32.totalorder %s30, 1
      %p132 = por %p130, %p131
      %p133 = scmp.ne.s32.totalorder %s124, %s125
      %p134 = scmp.eq.s32.totalorder %s30, 0
      %p135 = por %p133, %p134
      %p136 = scmp.ne.s32.totalorder %s124, %s125
      %p137 = scmp.eq.s32.totalorder %s31, 1
      %p138 = por %p136, %p137
      %p140 = scmp.ne.s32.totalorder %s125, %s139
      %p141 = scmp.eq.s32.totalorder %s31, 0
      %p142 = por %p140, %p141
      %s144 = sadd.s32 %s143, 1
      %p147 = scmp.eq.s32.totalorder %s25, 1
      %p148 = scmp.ne.s32.totalorder %s143, %s145
      %p149 = scmp.eq.s32.totalorder %s25, 0
      %p150 = por %p148, %p149
      %p151 = scmp.ne.s32.totalorder %s143, %s145
      %p152 = scmp.eq.s32.totalorder %s30, 1
      %p153 = por %p151, %p152
      %p154 = scmp.ne.s32.totalorder %s145, %s146
      %p155 = scmp.eq.s32.totalorder %s30, 0
      %p156 = por %p154, %p155
      %p157 = scmp.ne.s32.totalorder %s145, %s146
      %p158 = scmp.eq.s32.totalorder %s31, 1
      %p159 = por %p157, %p158
      %p161 = scmp.ne.s32.totalorder %s146, %s160
      %p162 = scmp.eq.s32.totalorder %s31, 0
      %p163 = por %p161, %p162
      %s165 = sadd.s32 %s164, 1
      %p168 = scmp.eq.s32.totalorder %s25, 1
      %p169 = scmp.ne.s32.totalorder %s164, %s166
      %p170 = scmp.eq.s32.totalorder %s25, 0
      %p171 = por %p169, %p170
      %p172 = scmp.ne.s32.totalorder %s164, %s166
      %p173 = scmp.eq.s32.totalorder %s30, 1
      %p174 = por %p172, %p173
      %p175 = scmp.ne.s32.totalorder %s166, %s167
      %p176 = scmp.eq.s32.totalorder %s30, 0
      %p177 = por %p175, %p176
      %p178 = scmp.ne.s32.totalorder %s166, %s167
      %p179 = scmp.eq.s32.totalorder %s31, 1
      %p180 = por %p178, %p179
      %p182 = scmp.ne.s32.totalorder %s167, %s181
      %p183 = scmp.eq.s32.totalorder %s31, 0
      %p184 = por %p182, %p183
      %s186 = sadd.s32 %s185, 1
      %p189 = scmp.eq.s32.totalorder %s25, 1
      %p190 = scmp.ne.s32.totalorder %s185, %s187
      %p191 = scmp.eq.s32.totalorder %s25, 0
      %p192 = por %p190, %p191
      %p193 = scmp.ne.s32.totalorder %s185, %s187
      %p194 = scmp.eq.s32.totalorder %s30, 1
      %p195 = por %p193, %p194
      %p196 = scmp.ne.s32.totalorder %s187, %s188
      %p197 = scmp.eq.s32.totalorder %s30, 0
      %p198 = por %p196, %p197
      %p199 = scmp.ne.s32.totalorder %s187, %s188
      %p200 = scmp.eq.s32.totalorder %s31, 1
      %p201 = por %p199, %p200
      %p203 = scmp.ne.s32.totalorder %s188, %s202
      %p204 = scmp.eq.s32.totalorder %s31, 0
      %p205 = por %p203, %p204
      %s207 = sadd.s32 %s206, 1
      %p210 = scmp.eq.s32.totalorder %s25, 1
      %p211 = scmp.ne.s32.totalorder %s206, %s208
      %p212 = scmp.eq.s32.totalorder %s25, 0
      %p213 = por %p211, %p212
      %p214 = scmp.ne.s32.totalorder %s206, %s208
      %p215 = scmp.eq.s32.totalorder %s30, 1
      %p216 = por %p214, %p215
      %p217 = scmp.ne.s32.totalorder %s208, %s209
      %p218 = scmp.eq.s32.totalorder %s30, 0
      %p219 = por %p217, %p218
      %p220 = scmp.ne.s32.totalorder %s208, %s209
      %p221 = scmp.eq.s32.totalorder %s31, 1
      %p222 = por %p220, %p221
      %p224 = scmp.ne.s32.totalorder %s209, %s223
      %p225 = scmp.eq.s32.totalorder %s31, 0
      %p226 = por %p224, %p225
      %s228 = sadd.s32 %s227, 1
      %p231 = scmp.eq.s32.totalorder %s25, 1
      %p232 = scmp.ne.s32.totalorder %s227, %s229
      %p233 = scmp.eq.s32.totalorder %s25, 0
      %p234 = por %p232, %p233
      %p235 = scmp.ne.s32.totalorder %s227, %s229
      %p236 = scmp.eq.s32.totalorder %s30, 1
      %p237 = por %p235, %p236
      %p238 = scmp.ne.s32.totalorder %s229, %s230
      %p239 = scmp.eq.s32.totalorder %s30, 0
      %p240 = por %p238, %p239
      %p241 = scmp.ne.s32.totalorder %s229, %s230
      %p242 = scmp.eq.s32.totalorder %s31, 1
      %p243 = por %p241, %p242
      %p245 = scmp.ne.s32.totalorder %s230, %s244
      %p246 = scmp.eq.s32.totalorder %s31, 0
      %p247 = por %p245, %p246
      %s249 = sadd.s32 %s248, 1
      %p252 = scmp.eq.s32.totalorder %s25, 1
      %p253 = scmp.ne.s32.totalorder %s248, %s250
      %p254 = scmp.eq.s32.totalorder %s25, 0
      %p255 = por %p253, %p254
      %p256 = scmp.ne.s32.totalorder %s248, %s250
      %p257 = scmp.eq.s32.totalorder %s30, 1
      %p258 = por %p256, %p257
      %p259 = scmp.ne.s32.totalorder %s250, %s251
      %p260 = scmp.eq.s32.totalorder %s30, 0
      %p261 = por %p259, %p260
      %p262 = scmp.ne.s32.totalorder %s250, %s251
      %p263 = scmp.eq.s32.totalorder %s31, 1
      %p264 = por %p262, %p263
      %p266 = scmp.ne.s32.totalorder %s251, %s265
      %p267 = scmp.eq.s32.totalorder %s31, 0
      %p268 = por %p266, %p267
      %s270 = sadd.s32 %s269, 1
      %p273 = scmp.eq.s32.totalorder %s25, 1
      %p274 = scmp.ne.s32.totalorder %s269, %s271
      %p275 = scmp.eq.s32.totalorder %s25, 0
      %p276 = por %p274, %p275
      %p277 = scmp.ne.s32.totalorder %s269, %s271
      %p278 = scmp.eq.s32.totalorder %s30, 1
      %p279 = por %p277, %p278
      %p280 = scmp.ne.s32.totalorder %s271, %s272
      %p281 = scmp.eq.s32.totalorder %s30, 0
      %p282 = por %p280, %p281
      %p283 = scmp.ne.s32.totalorder %s271, %s272
      %p284 = scmp.eq.s32.totalorder %s31, 1
      %p285 = por %p283, %p284
      %p287 = scmp.ne.s32.totalorder %s272, %s286
      %p288 = scmp.eq.s32.totalorder %s31, 0
      %p289 = por %p287, %p288
      %s290 = ssub.s32 %s25, %s32
      %p291 = scmp.eq.s32.totalorder %s290, 0
      %s293 = sadd.s32 %s292, 1
      %s294 = scalar_select %p291, %s292, %s293
      %p297 = pneg %p291
      %p298 = scmp.eq.s32.totalorder %s25, 1
      %p299 = por %p297, %p298
      %p300 = scmp.ne.s32.totalorder %s292, %s295
      %p301 = scmp.eq.s32.totalorder %s25, 0
      %p302 = por %p300, %p301
      %p303 = scmp.ne.s32.totalorder %s292, %s295
      %p304 = scmp.eq.s32.totalorder %s30, 1
      %p305 = por %p303, %p304
      %p306 = scmp.ne.s32.totalorder %s295, %s296
      %p307 = scmp.eq.s32.totalorder %s30, 0
      %p308 = por %p306, %p307
      %p309 = scmp.ne.s32.totalorder %s295, %s296
      %p310 = scmp.eq.s32.totalorder %s31, 1
      %p311 = por %p309, %p310
      %p313 = scmp.ne.s32.totalorder %s296, %s312
      %p314 = scmp.eq.s32.totalorder %s31, 0
      %p315 = por %p313, %p314
      %p316 = scmp.le.s32.totalorder 1, %s25
      %p317 = scmp.lt.s32.totalorder %s25, 3
      %p318 = pnand %p316, %p317
      %p319 = pneg %p318
      // Predicated region
      $region9: #{tpu_custom_call.1} parent=5 // pred_check
        _
      $region10: #{tpu_custom_call.1} parent=5 // pred_check_branch
        %321 = sbr.rel (%p318) target = $region12
      $region11: #{tpu_custom_call.1} parent=5 // pred_region
        %s322 = ssub.s32 %s25, 1
        // Predicated region
        $region13: #{tpu_custom_call.1} parent=11 // pred_check
          %p323 = pneg %p72
        $region14: #{tpu_custom_call.1} parent=11 // pred_check_branch
          %325 = sbr.rel (%p323) target = $region16
        $region15: #{tpu_custom_call.1} parent=11 // pred_region
          _
        $region16: #{tpu_custom_call.1} parent=11 // pred_fallthru
          _
        // Predicated region
        $region17: #{tpu_custom_call.1} parent=11 // pred_check
          %p326 = pneg %p93
        $region18: #{tpu_custom_call.1} parent=11 // pred_check_branch
          %328 = sbr.rel (%p326) target = $region20
        $region19: #{tpu_custom_call.1} parent=11 // pred_region
          _
        $region20: #{tpu_custom_call.1} parent=11 // pred_fallthru
          _
        // Predicated region
        $region21: #{tpu_custom_call.1} parent=11 // pred_check
          %p329 = pneg %p114
        $region22: #{tpu_custom_call.1} parent=11 // pred_check_branch
          %331 = sbr.rel (%p329) target = $region24
        $region23: #{tpu_custom_call.1} parent=11 // pred_region
          _
        $region24: #{tpu_custom_call.1} parent=11 // pred_fallthru
          _
        // Predicated region
        $region25: #{tpu_custom_call.1} parent=11 // pred_check
          %p332 = pneg %p135
        $region26: #{tpu_custom_call.1} parent=11 // pred_check_branch
          %334 = sbr.rel (%p332) target = $region28
        $region27: #{tpu_custom_call.1} parent=11 // pred_region
          _
        $region28: #{tpu_custom_call.1} parent=11 // pred_fallthru
          _
        // Predicated region
        $region29: #{tpu_custom_call.1} parent=11 // pred_check
          %p335 = pneg %p156
        $region30: #{tpu_custom_call.1} parent=11 // pred_check_branch
          %337 = sbr.rel (%p335) target = $region32
        $region31: #{tpu_custom_call.1} parent=11 // pred_region
          _
        $region32: #{tpu_custom_call.1} parent=11 // pred_fallthru
          _
        // Predicated region
        $region33: #{tpu_custom_call.1} parent=11 // pred_check
          %p338 = pneg %p177
        $region34: #{tpu_custom_call.1} parent=11 // pred_check_branch
          %340 = sbr.rel (%p338) target = $region36
        $region35: #{tpu_custom_call.1} parent=11 // pred_region
          _
        $region36: #{tpu_custom_call.1} parent=11 // pred_fallthru
          _
        // Predicated region
        $region37: #{tpu_custom_call.1} parent=11 // pred_check
          %p341 = pneg %p198
        $region38: #{tpu_custom_call.1} parent=11 // pred_check_branch
          %343 = sbr.rel (%p341) target = $region40
        $region39: #{tpu_custom_call.1} parent=11 // pred_region
          _
        $region40: #{tpu_custom_call.1} parent=11 // pred_fallthru
          _
        // Predicated region
        $region41: #{tpu_custom_call.1} parent=11 // pred_check
          %p344 = pneg %p219
        $region42: #{tpu_custom_call.1} parent=11 // pred_check_branch
          %346 = sbr.rel (%p344) target = $region44
        $region43: #{tpu_custom_call.1} parent=11 // pred_region
          _
        $region44: #{tpu_custom_call.1} parent=11 // pred_fallthru
          _
        // Predicated region
        $region45: #{tpu_custom_call.1} parent=11 // pred_check
          %p347 = pneg %p240
        $region46: #{tpu_custom_call.1} parent=11 // pred_check_branch
          %349 = sbr.rel (%p347) target = $region48
        $region47: #{tpu_custom_call.1} parent=11 // pred_region
          %s351 = ssub.s32 16, 16
          %352 = vsyncadd [#allocation6], %s351
          %s354 = sshll.u32 [#allocation5], 4
          %s355 = int_to_ptr.vmem [resolvable:$true] %s354
          %357 = dma.hbm_to_vmem [thread:$0]  %s9, 16, %s355, [#allocation6]
        $region48: #{tpu_custom_call.1} parent=11 // pred_fallthru
          _
        // Predicated region
        $region49: #{tpu_custom_call.1} parent=11 // pred_check
          %p358 = pneg %p261
        $region50: #{tpu_custom_call.1} parent=11 // pred_check_branch
          %360 = sbr.rel (%p358) target = $region52
        $region51: #{tpu_custom_call.1} parent=11 // pred_region
          _
        $region52: #{tpu_custom_call.1} parent=11 // pred_fallthru
          _
        // Predicated region
        $region53: #{tpu_custom_call.1} parent=11 // pred_check
          %p361 = pneg %p282
        $region54: #{tpu_custom_call.1} parent=11 // pred_check_branch
          %363 = sbr.rel (%p361) target = $region56
        $region55: #{tpu_custom_call.1} parent=11 // pred_region
          _
        $region56: #{tpu_custom_call.1} parent=11 // pred_fallthru
          _
      $region12: #{tpu_custom_call.1} parent=5 // pred_fallthru
        _
      %p364 = scmp.lt.s32.totalorder %s25, 2
      // Predicated region
      $region57: #{tpu_custom_call.1} parent=5 // pred_check
        %p365 = pneg %p364
      $region58: #{tpu_custom_call.1} parent=5 // pred_check_branch
        %367 = sbr.rel (%p365) target = $region60
      $region59: #{tpu_custom_call.1} parent=5 // pred_region
        // Predicated region
        $region61: #{tpu_custom_call.1} parent=59 // pred_check
          %p368 = pneg %p45
        $region62: #{tpu_custom_call.1} parent=59 // pred_check_branch
          %370 = sbr.rel (%p368) target = $region64
        $region63: #{tpu_custom_call.1} parent=59 // pred_region
          %s371 = sand.u32 %s35, 1
          %s372 = scalar_lea.sflag [#allocation3], %s371
          %s373 = sand.u32 %s35, 1
          %s374 = smul.addr %s373, 8
          %s375 = scalar_lea.vmem [#allocation2], %s374
          %s377 = ssub.s32 128, 128
          %378 = vsyncadd %s372, %s377
          %s379 = smul.addr %s25, 128
          %s380 = scalar_lea.hbm %s0, %s379
          %s382 = sshll.u32 %s375, 4
          %s383 = int_to_ptr.vmem [resolvable:$true] %s382
          %385 = dma.hbm_to_vmem [thread:$0]  %s380, 128, %s383, %s372
        $region64: #{tpu_custom_call.1} parent=59 // pred_fallthru
          _
      $region60: #{tpu_custom_call.1} parent=5 // pred_fallthru
        _
      %p386 = scmp.le.s32.totalorder 1, %s25
      %p387 = scmp.lt.s32.totalorder %s25, 3
      %p388 = pnand %p386, %p387
      %p389 = pneg %p388
      // Predicated region
      $region65: #{tpu_custom_call.1} parent=5 // pred_check
        _
      $region66: #{tpu_custom_call.1} parent=5 // pred_check_branch
        %391 = sbr.rel (%p388) target = $region68
      $region67: #{tpu_custom_call.1} parent=5 // pred_region
        %s392 = ssub.s32 %s25, 1
        %s393 = sand.u32 %s38, 1
        %s394 = scalar_lea.sflag [#allocation3], %s393
        %s395 = sand.u32 %s38, 1
        %s396 = smul.addr %s395, 8
        %s397 = scalar_lea.vmem [#allocation2], %s396
        // Predicated region
        $region69: #{tpu_custom_call.1} parent=67 // pred_check
          %p398 = pneg %p51
        $region70: #{tpu_custom_call.1} parent=67 // pred_check_branch
          %400 = sbr.rel (%p398) target = $region72
        $region71: #{tpu_custom_call.1} parent=67 // pred_region
          %401 = dma.done %s394, 128
        $region72: #{tpu_custom_call.1} parent=67 // pred_fallthru
          _
        // Predicated region
        $region73: #{tpu_custom_call.1} parent=67 // pred_check
          %p402 = pneg %p240
        $region74: #{tpu_custom_call.1} parent=67 // pred_check_branch
          %404 = sbr.rel (%p402) target = $region76
        $region75: #{tpu_custom_call.1} parent=67 // pred_region
          %405 = dma.done [#allocation6], 16
        $region76: #{tpu_custom_call.1} parent=67 // pred_fallthru
          _
        %s406 = sand.u32 %s38, 1
        %s407 = scalar_lea.sflag [#allocation3], %s406
        %s408 = sand.u32 %s38, 1
        %s409 = smul.addr %s408, 8
        %s410 = scalar_lea.vmem [#allocation2], %s409
        %p411 = pneg %p51
        %p412 = pneg %p48
        %p413 = pneg %p72
        %p414 = pneg %p69
        %p415 = pneg %p93
        %p416 = pneg %p90
        %p417 = pneg %p114
        %p418 = pneg %p111
        %p419 = pneg %p135
        %p420 = pneg %p132
        %p421 = pneg %p156
        %p422 = pneg %p153
        %p423 = pneg %p177
        %p424 = pneg %p174
        %p425 = pneg %p198
        %p426 = pneg %p195
        %p427 = pneg %p219
        %p428 = pneg %p216
        %p429 = pneg %p240
        %p430 = pneg %p237
        %p431 = pneg %p261
        %p432 = pneg %p258
        %p433 = pneg %p282
        %p434 = pneg %p279
        %p435 = pneg %p308
        %p436 = pneg %p305
        %s437 = sand.u32 %s295, 1
        %s438 = scalar_lea.sflag [#allocation4], %s437
        %s439 = sand.u32 %s295, 1
        %s440 = smul.addr %s439, 8
        %s441 = scalar_lea.vmem [#allocation7], %s440
        %v442 = vld [vmem:[%s397] sm:$0xff]
        %vm443 = vcmask 261120
        %v444 = vsel %vm443, %v442, 0.0
        %445 = vadd.xlane.f32.xlu0 %v444
        %v446 = vpop.xlane.xlu0 %445
        %v447 = vrcp.pop 32.0
        %v448 = vmul.f32 %v446, %v447
        %v449 = vsub.f32 %v442, %v448
        %v450 = vmul.f32 %v449, %v449
        %v451 = vsel %vm443, %v450, 0.0
        %452 = vadd.xlane.f32.xlu0 %v451
        %v453 = vpop.xlane.xlu0 %452
        %v454 = vmul.f32 %v453, %v447
        %v455 = vadd.f32 %v454, 1e-05
        %v456 = vrsqrt.pop %v455
        %v457 = vmul.f32 %v449, %v456
        %v458 = vld [vmem:[%s1] sm:$0x1]
        %v460 = vlaneseq
        %v461 = vshrl.u32 %v460, 7
        %v462 = vsub.s32 0, %v461
        %v463 = vrot.slane %v458, %v462
        %v465 = vmul.f32 %v457, %v463
        %v466 = vld [vmem:[%s2] sm:$0x1]
        %v468 = vlaneseq
        %v469 = vshrl.u32 %v468, 7
        %v470 = vsub.s32 0, %v469
        %v471 = vrot.slane %v466, %v470
        %v473 = vadd.f32 %v465, %v471
        %v474 = vld [vmem:[%s3] sm:$0xff]
        %v475 = vld [vmem:[%s3 + $0x8] sm:$0xff]
        %v476 = vld [vmem:[%s3 + $0x10] sm:$0xff]
        %v477 = vld [vmem:[%s3 + $0x18] sm:$0xff]
        %v479 = vsel %vm443, %v473, 0
        %481 = vmatprep.subr.mxu0 0.0
        %482 = vmatpush1.msra.mxu0 %v474
        %483 = vmatprep.subr.mxu0 0.0
        %484 = vmatpush1.msra.mxu0 %v475
        %485 = vmatprep.subr.mxu0 0.0
        %486 = vmatpush1.msra.mxu0 %v476
        %487 = vmatprep.subr.mxu0 0.0
        %488 = vmatpush1.msra.mxu0 %v477
        %489 = vmatprep.subr.mxu0 0.0
        %490 = vmatpush1.msra.mxu0 0.0
        %491 = vmatprep.subr.mxu0 0.0
        %492 = vmatpush1.msra.mxu0 0.0
        %493 = vmatprep.subr.mxu0 0.0
        %494 = vmatpush1.msra.mxu0 0.0
        %495 = vmatprep.subr.mxu0 0.0
        %496 = vmatpush1.msra.mxu0 0.0
        %497 = vmatprep.subr.mxu0 0.0
        %498 = vmatpush1.msra.mxu0 0.0
        %499 = vmatprep.subr.mxu0 0.0
        %500 = vmatpush1.msra.mxu0 0.0
        %501 = vmatprep.subr.mxu0 0.0
        %502 = vmatpush1.msra.mxu0 0.0
        %503 = vmatprep.subr.mxu0 0.0
        %504 = vmatpush1.msra.mxu0 0.0
        %505 = vmatprep.subr.mxu0 0.0
        %506 = vmatpush1.msra.mxu0 0.0
        %507 = vmatprep.subr.mxu0 0.0
        %508 = vmatpush1.msra.mxu0 0.0
        %509 = vmatprep.subr.mxu0 0.0
        %510 = vmatpush1.msra.mxu0 0.0
        %511 = vmatprep.subr.mxu0 0.0
        %512 = vmatpush1.msra.mxu0 0.0
        %513 = vmatprep.subr.mxu0 0.0
        %514 = vmatpush1.msra.mxu0 0.0
        %515 = vmatprep.subr.mxu0 0.0
        %516 = vmatpush1.msra.mxu0 0.0
        %517 = vmatprep.subr.mxu0 0.0
        %518 = vmatpush1.msra.mxu0 0.0
        %519 = vmatprep.subr.mxu0 0.0
        %520 = vmatpush1.msra.mxu0 0.0
        %521 = vmatprep.subr.mxu0 0.0
        %522 = vmatpush1.msra.mxu0 0.0
        %523 = vmatprep.subr.mxu0 0.0
        %524 = vmatpush1.msra.mxu0 0.0
        %525 = vmatprep.subr.mxu0 0.0
        %526 = vmatpush1.msra.mxu0 0.0
        %527 = vmatprep.subr.mxu0 0.0
        %528 = vmatpush1.msra.mxu0 0.0
        %529 = vmatprep.subr.mxu0 0.0
        %530 = vmatpush1.msra.mxu0 0.0
        %531 = vmatprep.subr.mxu0 0.0
        %532 = vmatpush1.msra.mxu0 0.0
        %533 = vmatprep.subr.mxu0 0.0
        %534 = vmatpush1.msra.mxu0 0.0
        %535 = vmatprep.subr.mxu0 0.0
        %536 = vmatpush1.msra.mxu0 0.0
        %537 = vmatprep.subr.mxu0 0.0
        %538 = vmatpush1.msra.mxu0 0.0
        %539 = vmatprep.subr.mxu0 0.0
        %540 = vmatpush1.msra.mxu0 0.0
        %541 = vmatprep.subr.mxu0 0.0
        %542 = vmatpush1.msra.mxu0 0.0
        %543 = vmatprep.subr.mxu0 0.0
        %544 = vmatpush1.msra.mxu0 0.0
        %545 = vmatprep.mubr.f32.mxu0 0.0
        %546 = vmatmul.mubr.f32.gmra.mrb[0].mxu0 %v479
        %v547 = vpop.f32.mrb[0].mxu0
        %v548 = vadd.f32 0.0, %v547
        %v549 = vpop.f32.mrb[0].mxu0
        %550 = vdwg.mxu0
        %552 = vrot.lane.b32.xlu0 %v548, 120
        %v553 = vpop.permute.xlu0 %552
        %554 = vrot.lane.b32.xlu0 %v548, 112
        %v555 = vpop.permute.xlu0 %554
        %556 = vrot.lane.b32.xlu0 %v548, 104
        %v557 = vpop.permute.xlu0 %556
        %558 = vrot.lane.b32.xlu0 %v548, 96
        %v559 = vpop.permute.xlu0 %558
        %vm560 = vcmask 64512
        %v561 = vsel %vm560, %v548, 0
        %v563 = vsel %vm560, %v559, 0
        %565 = vmatprep.subr.mxu0 0.0
        %566 = vmatpush1.xpose.msra.mxu0 %v563
        %567 = vmatprep.subr.mxu0 0.0
        %568 = vmatpush1.xpose.msra.mxu0 0.0
        %569 = vmatprep.subr.mxu0 0.0
        %570 = vmatpush1.xpose.msra.mxu0 0.0
        %571 = vmatprep.subr.mxu0 0.0
        %572 = vmatpush1.xpose.msra.mxu0 0.0
        %573 = vmatprep.subr.mxu0 0.0
        %574 = vmatpush1.xpose.msra.mxu0 0.0
        %575 = vmatprep.subr.mxu0 0.0
        %576 = vmatpush1.xpose.msra.mxu0 0.0
        %577 = vmatprep.subr.mxu0 0.0
        %578 = vmatpush1.xpose.msra.mxu0 0.0
        %579 = vmatprep.subr.mxu0 0.0
        %580 = vmatpush1.xpose.msra.mxu0 0.0
        %581 = vmatprep.subr.mxu0 0.0
        %582 = vmatpush1.xpose.msra.mxu0 0.0
        %583 = vmatprep.subr.mxu0 0.0
        %584 = vmatpush1.xpose.msra.mxu0 0.0
        %585 = vmatprep.subr.mxu0 0.0
        %586 = vmatpush1.xpose.msra.mxu0 0.0
        %587 = vmatprep.subr.mxu0 0.0
        %588 = vmatpush1.xpose.msra.mxu0 0.0
        %589 = vmatprep.subr.mxu0 0.0
        %590 = vmatpush1.xpose.msra.mxu0 0.0
        %591 = vmatprep.subr.mxu0 0.0
        %592 = vmatpush1.xpose.msra.mxu0 0.0
        %593 = vmatprep.subr.mxu0 0.0
        %594 = vmatpush1.xpose.msra.mxu0 0.0
        %595 = vmatprep.subr.mxu0 0.0
        %596 = vmatpush1.xpose.msra.mxu0 0.0
        %597 = vmatprep.subr.mxu0 0.0
        %598 = vmatpush1.xpose.msra.mxu0 0.0
        %599 = vmatprep.subr.mxu0 0.0
        %600 = vmatpush1.xpose.msra.mxu0 0.0
        %601 = vmatprep.subr.mxu0 0.0
        %602 = vmatpush1.xpose.msra.mxu0 0.0
        %603 = vmatprep.subr.mxu0 0.0
        %604 = vmatpush1.xpose.msra.mxu0 0.0
        %605 = vmatprep.subr.mxu0 0.0
        %606 = vmatpush1.xpose.msra.mxu0 0.0
        %607 = vmatprep.subr.mxu0 0.0
        %608 = vmatpush1.xpose.msra.mxu0 0.0
        %609 = vmatprep.subr.mxu0 0.0
        %610 = vmatpush1.xpose.msra.mxu0 0.0
        %611 = vmatprep.subr.mxu0 0.0
        %612 = vmatpush1.xpose.msra.mxu0 0.0
        %613 = vmatprep.subr.mxu0 0.0
        %614 = vmatpush1.xpose.msra.mxu0 0.0
        %615 = vmatprep.subr.mxu0 0.0
        %616 = vmatpush1.xpose.msra.mxu0 0.0
        %617 = vmatprep.subr.mxu0 0.0
        %618 = vmatpush1.xpose.msra.mxu0 0.0
        %619 = vmatprep.subr.mxu0 0.0
        %620 = vmatpush1.xpose.msra.mxu0 0.0
        %621 = vmatprep.subr.mxu0 0.0
        %622 = vmatpush1.xpose.msra.mxu0 0.0
        %623 = vmatprep.subr.mxu0 0.0
        %624 = vmatpush1.xpose.msra.mxu0 0.0
        %625 = vmatprep.subr.mxu0 0.0
        %626 = vmatpush1.xpose.msra.mxu0 0.0
        %627 = vmatprep.subr.mxu0 0.0
        %628 = vmatpush1.xpose.msra.mxu0 0.0
        %629 = vmatprep.mubr.f32.mxu0 0.0
        %630 = vmatmul.mubr.f32.gmra.mrb[0].mxu0 %v561
        %v631 = vpop.f32.mrb[0].mxu0
        %v632 = vadd.f32 0.0, %v631
        %v633 = vpop.f32.mrb[0].mxu0
        %634 = vdwg.mxu0
        %635 = vrot.lane.b32.xlu0 %v553, 96
        %v636 = vpop.permute.xlu0 %635
        %v637 = vsel %vm560, %v553, 0
        %v639 = vsel %vm560, %v636, 0
        %641 = vmatprep.subr.mxu0 0.0
        %642 = vmatpush1.xpose.msra.mxu0 %v639
        %643 = vmatprep.subr.mxu0 0.0
        %644 = vmatpush1.xpose.msra.mxu0 0.0
        %645 = vmatprep.subr.mxu0 0.0
        %646 = vmatpush1.xpose.msra.mxu0 0.0
        %647 = vmatprep.subr.mxu0 0.0
        %648 = vmatpush1.xpose.msra.mxu0 0.0
        %649 = vmatprep.subr.mxu0 0.0
        %650 = vmatpush1.xpose.msra.mxu0 0.0
        %651 = vmatprep.subr.mxu0 0.0
        %652 = vmatpush1.xpose.msra.mxu0 0.0
        %653 = vmatprep.subr.mxu0 0.0
        %654 = vmatpush1.xpose.msra.mxu0 0.0
        %655 = vmatprep.subr.mxu0 0.0
        %656 = vmatpush1.xpose.msra.mxu0 0.0
        %657 = vmatprep.subr.mxu0 0.0
        %658 = vmatpush1.xpose.msra.mxu0 0.0
        %659 = vmatprep.subr.mxu0 0.0
        %660 = vmatpush1.xpose.msra.mxu0 0.0
        %661 = vmatprep.subr.mxu0 0.0
        %662 = vmatpush1.xpose.msra.mxu0 0.0
        %663 = vmatprep.subr.mxu0 0.0
        %664 = vmatpush1.xpose.msra.mxu0 0.0
        %665 = vmatprep.subr.mxu0 0.0
        %666 = vmatpush1.xpose.msra.mxu0 0.0
        %667 = vmatprep.subr.mxu0 0.0
        %668 = vmatpush1.xpose.msra.mxu0 0.0
        %669 = vmatprep.subr.mxu0 0.0
        %670 = vmatpush1.xpose.msra.mxu0 0.0
        %671 = vmatprep.subr.mxu0 0.0
        %672 = vmatpush1.xpose.msra.mxu0 0.0
        %673 = vmatprep.subr.mxu0 0.0
        %674 = vmatpush1.xpose.msra.mxu0 0.0
        %675 = vmatprep.subr.mxu0 0.0
        %676 = vmatpush1.xpose.msra.mxu0 0.0
        %677 = vmatprep.subr.mxu0 0.0
        %678 = vmatpush1.xpose.msra.mxu0 0.0
        %679 = vmatprep.subr.mxu0 0.0
        %680 = vmatpush1.xpose.msra.mxu0 0.0
        %681 = vmatprep.subr.mxu0 0.0
        %682 = vmatpush1.xpose.msra.mxu0 0.0
        %683 = vmatprep.subr.mxu0 0.0
        %684 = vmatpush1.xpose.msra.mxu0 0.0
        %685 = vmatprep.subr.mxu0 0.0
        %686 = vmatpush1.xpose.msra.mxu0 0.0
        %687 = vmatprep.subr.mxu0 0.0
        %688 = vmatpush1.xpose.msra.mxu0 0.0
        %689 = vmatprep.subr.mxu0 0.0
        %690 = vmatpush1.xpose.msra.mxu0 0.0
        %691 = vmatprep.subr.mxu0 0.0
        %692 = vmatpush1.xpose.msra.mxu0 0.0
        %693 = vmatprep.subr.mxu0 0.0
        %694 = vmatpush1.xpose.msra.mxu0 0.0
        %695 = vmatprep.subr.mxu0 0.0
        %696 = vmatpush1.xpose.msra.mxu0 0.0
        %697 = vmatprep.subr.mxu0 0.0
        %698 = vmatpush1.xpose.msra.mxu0 0.0
        %699 = vmatprep.subr.mxu0 0.0
        %700 = vmatpush1.xpose.msra.mxu0 0.0
        %701 = vmatprep.subr.mxu0 0.0
        %702 = vmatpush1.xpose.msra.mxu0 0.0
        %703 = vmatprep.subr.mxu0 0.0
        %704 = vmatpush1.xpose.msra.mxu0 0.0
        %705 = vmatprep.mubr.f32.mxu0 0.0
        %706 = vmatmul.mubr.f32.gmra.mrb[0].mxu0 %v637
        %v707 = vpop.f32.mrb[0].mxu0
        %v708 = vadd.f32 0.0, %v707
        %v709 = vpop.f32.mrb[0].mxu0
        %710 = vdwg.mxu0
        %711 = vrot.lane.b32.xlu0 %v555, 96
        %v712 = vpop.permute.xlu0 %711
        %v713 = vsel %vm560, %v555, 0
        %v715 = vsel %vm560, %v712, 0
        %717 = vmatprep.subr.mxu0 0.0
        %718 = vmatpush1.xpose.msra.mxu0 %v715
        %719 = vmatprep.subr.mxu0 0.0
        %720 = vmatpush1.xpose.msra.mxu0 0.0
        %721 = vmatprep.subr.mxu0 0.0
        %722 = vmatpush1.xpose.msra.mxu0 0.0
        %723 = vmatprep.subr.mxu0 0.0
        %724 = vmatpush1.xpose.msra.mxu0 0.0
        %725 = vmatprep.subr.mxu0 0.0
        %726 = vmatpush1.xpose.msra.mxu0 0.0
        %727 = vmatprep.subr.mxu0 0.0
        %728 = vmatpush1.xpose.msra.mxu0 0.0
        %729 = vmatprep.subr.mxu0 0.0
        %730 = vmatpush1.xpose.msra.mxu0 0.0
        %731 = vmatprep.subr.mxu0 0.0
        %732 = vmatpush1.xpose.msra.mxu0 0.0
        %733 = vmatprep.subr.mxu0 0.0
        %734 = vmatpush1.xpose.msra.mxu0 0.0
        %735 = vmatprep.subr.mxu0 0.0
        %736 = vmatpush1.xpose.msra.mxu0 0.0
        %737 = vmatprep.subr.mxu0 0.0
        %738 = vmatpush1.xpose.msra.mxu0 0.0
        %739 = vmatprep.subr.mxu0 0.0
        %740 = vmatpush1.xpose.msra.mxu0 0.0
        %741 = vmatprep.subr.mxu0 0.0
        %742 = vmatpush1.xpose.msra.mxu0 0.0
        %743 = vmatprep.subr.mxu0 0.0
        %744 = vmatpush1.xpose.msra.mxu0 0.0
        %745 = vmatprep.subr.mxu0 0.0
        %746 = vmatpush1.xpose.msra.mxu0 0.0
        %747 = vmatprep.subr.mxu0 0.0
        %748 = vmatpush1.xpose.msra.mxu0 0.0
        %749 = vmatprep.subr.mxu0 0.0
        %750 = vmatpush1.xpose.msra.mxu0 0.0
        %751 = vmatprep.subr.mxu0 0.0
        %752 = vmatpush1.xpose.msra.mxu0 0.0
        %753 = vmatprep.subr.mxu0 0.0
        %754 = vmatpush1.xpose.msra.mxu0 0.0
        %755 = vmatprep.subr.mxu0 0.0
        %756 = vmatpush1.xpose.msra.mxu0 0.0
        %757 = vmatprep.subr.mxu0 0.0
        %758 = vmatpush1.xpose.msra.mxu0 0.0
        %759 = vmatprep.subr.mxu0 0.0
        %760 = vmatpush1.xpose.msra.mxu0 0.0
        %761 = vmatprep.subr.mxu0 0.0
        %762 = vmatpush1.xpose.msra.mxu0 0.0
        %763 = vmatprep.subr.mxu0 0.0
        %764 = vmatpush1.xpose.msra.mxu0 0.0
        %765 = vmatprep.subr.mxu0 0.0
        %766 = vmatpush1.xpose.msra.mxu0 0.0
        %767 = vmatprep.subr.mxu0 0.0
        %768 = vmatpush1.xpose.msra.mxu0 0.0
        %769 = vmatprep.subr.mxu0 0.0
        %770 = vmatpush1.xpose.msra.mxu0 0.0
        %771 = vmatprep.subr.mxu0 0.0
        %772 = vmatpush1.xpose.msra.mxu0 0.0
        %773 = vmatprep.subr.mxu0 0.0
        %774 = vmatpush1.xpose.msra.mxu0 0.0
        %775 = vmatprep.subr.mxu0 0.0
        %776 = vmatpush1.xpose.msra.mxu0 0.0
        %777 = vmatprep.subr.mxu0 0.0
        %778 = vmatpush1.xpose.msra.mxu0 0.0
        %779 = vmatprep.subr.mxu0 0.0
        %780 = vmatpush1.xpose.msra.mxu0 0.0
        %781 = vmatprep.mubr.f32.mxu0 0.0
        %782 = vmatmul.mubr.f32.gmra.mrb[0].mxu0 %v713
        %v783 = vpop.f32.mrb[0].mxu0
        %v784 = vadd.f32 0.0, %v783
        %v785 = vpop.f32.mrb[0].mxu0
        %786 = vdwg.mxu0
        %787 = vrot.lane.b32.xlu0 %v557, 96
        %v788 = vpop.permute.xlu0 %787
        %v789 = vsel %vm560, %v557, 0
        %v791 = vsel %vm560, %v788, 0
        %793 = vmatprep.subr.mxu0 0.0
        %794 = vmatpush1.xpose.msra.mxu0 %v791
        %795 = vmatprep.subr.mxu0 0.0
        %796 = vmatpush1.xpose.msra.mxu0 0.0
        %797 = vmatprep.subr.mxu0 0.0
        %798 = vmatpush1.xpose.msra.mxu0 0.0
        %799 = vmatprep.subr.mxu0 0.0
        %800 = vmatpush1.xpose.msra.mxu0 0.0
        %801 = vmatprep.subr.mxu0 0.0
        %802 = vmatpush1.xpose.msra.mxu0 0.0
        %803 = vmatprep.subr.mxu0 0.0
        %804 = vmatpush1.xpose.msra.mxu0 0.0
        %805 = vmatprep.subr.mxu0 0.0
        %806 = vmatpush1.xpose.msra.mxu0 0.0
        %807 = vmatprep.subr.mxu0 0.0
        %808 = vmatpush1.xpose.msra.mxu0 0.0
        %809 = vmatprep.subr.mxu0 0.0
        %810 = vmatpush1.xpose.msra.mxu0 0.0
        %811 = vmatprep.subr.mxu0 0.0
        %812 = vmatpush1.xpose.msra.mxu0 0.0
        %813 = vmatprep.subr.mxu0 0.0
        %814 = vmatpush1.xpose.msra.mxu0 0.0
        %815 = vmatprep.subr.mxu0 0.0
        %816 = vmatpush1.xpose.msra.mxu0 0.0
        %817 = vmatprep.subr.mxu0 0.0
        %818 = vmatpush1.xpose.msra.mxu0 0.0
        %819 = vmatprep.subr.mxu0 0.0
        %820 = vmatpush1.xpose.msra.mxu0 0.0
        %821 = vmatprep.subr.mxu0 0.0
        %822 = vmatpush1.xpose.msra.mxu0 0.0
        %823 = vmatprep.subr.mxu0 0.0
        %824 = vmatpush1.xpose.msra.mxu0 0.0
        %825 = vmatprep.subr.mxu0 0.0
        %826 = vmatpush1.xpose.msra.mxu0 0.0
        %827 = vmatprep.subr.mxu0 0.0
        %828 = vmatpush1.xpose.msra.mxu0 0.0
        %829 = vmatprep.subr.mxu0 0.0
        %830 = vmatpush1.xpose.msra.mxu0 0.0
        %831 = vmatprep.subr.mxu0 0.0
        %832 = vmatpush1.xpose.msra.mxu0 0.0
        %833 = vmatprep.subr.mxu0 0.0
        %834 = vmatpush1.xpose.msra.mxu0 0.0
        %835 = vmatprep.subr.mxu0 0.0
        %836 = vmatpush1.xpose.msra.mxu0 0.0
        %837 = vmatprep.subr.mxu0 0.0
        %838 = vmatpush1.xpose.msra.mxu0 0.0
        %839 = vmatprep.subr.mxu0 0.0
        %840 = vmatpush1.xpose.msra.mxu0 0.0
        %841 = vmatprep.subr.mxu0 0.0
        %842 = vmatpush1.xpose.msra.mxu0 0.0
        %843 = vmatprep.subr.mxu0 0.0
        %844 = vmatpush1.xpose.msra.mxu0 0.0
        %845 = vmatprep.subr.mxu0 0.0
        %846 = vmatpush1.xpose.msra.mxu0 0.0
        %847 = vmatprep.subr.mxu0 0.0
        %848 = vmatpush1.xpose.msra.mxu0 0.0
        %849 = vmatprep.subr.mxu0 0.0
        %850 = vmatpush1.xpose.msra.mxu0 0.0
        %851 = vmatprep.subr.mxu0 0.0
        %852 = vmatpush1.xpose.msra.mxu0 0.0
        %853 = vmatprep.subr.mxu0 0.0
        %854 = vmatpush1.xpose.msra.mxu0 0.0
        %855 = vmatprep.subr.mxu0 0.0
        %856 = vmatpush1.xpose.msra.mxu0 0.0
        %857 = vmatprep.mubr.f32.mxu0 0.0
        %858 = vmatmul.mubr.f32.gmra.mrb[0].mxu0 %v789
        %v859 = vpop.f32.mrb[0].mxu0
        %v860 = vadd.f32 0.0, %v859
        %v861 = vpop.f32.mrb[0].mxu0
        %862 = vdwg.mxu0
        %v863 = vmul.f32 %v632, 0.35355338
        %v864 = vmul.f32 %v708, 0.35355338
        %v865 = vmul.f32 %v784, 0.35355338
        %v866 = vmul.f32 %v860, 0.35355338
        %v867 = vsel %vm560, %v863, -inf
        %868 = vmax.xlane.f32.xlu0 %v867
        %v869 = vpop.xlane.xlu0 %868
        %v870 = vsel %vm560, %v864, -inf
        %871 = vmax.xlane.f32.xlu0 %v870
        %v872 = vpop.xlane.xlu0 %871
        %v873 = vsel %vm560, %v865, -inf
        %874 = vmax.xlane.f32.xlu0 %v873
        %v875 = vpop.xlane.xlu0 %874
        %v876 = vsel %vm560, %v866, -inf
        %877 = vmax.xlane.f32.xlu0 %v876
        %v878 = vpop.xlane.xlu0 %877
        %v879 = vsub.f32 %v863, %v869
        %v880 = vsub.f32 %v864, %v872
        %v881 = vsub.f32 %v865, %v875
        %v882 = vsub.f32 %v866, %v878
        %v883 = vmul.f32 %v879, 1.442695
        %v884 = vpow.pop %v883
        %v885 = vmul.f32 %v880, 1.442695
        %v886 = vpow.pop %v885
        %v887 = vmul.f32 %v881, 1.442695
        %v888 = vpow.pop %v887
        %v889 = vmul.f32 %v882, 1.442695
        %v890 = vpow.pop %v889
        %v891 = vsel %vm560, %v884, 0.0
        %892 = vadd.xlane.f32.xlu0 %v891
        %v893 = vpop.xlane.xlu0 %892
        %v894 = vsel %vm560, %v886, 0.0
        %895 = vadd.xlane.f32.xlu0 %v894
        %v896 = vpop.xlane.xlu0 %895
        %v897 = vsel %vm560, %v888, 0.0
        %898 = vadd.xlane.f32.xlu0 %v897
        %v899 = vpop.xlane.xlu0 %898
        %v900 = vsel %vm560, %v890, 0.0
        %901 = vadd.xlane.f32.xlu0 %v900
        %v902 = vpop.xlane.xlu0 %901
        %v903 = vrcp.pop %v893
        %v904 = vmul.f32 %v884, %v903
        %v905 = vrcp.pop %v896
        %v906 = vmul.f32 %v886, %v905
        %v907 = vrcp.pop %v899
        %v908 = vmul.f32 %v888, %v907
        %v909 = vrcp.pop %v902
        %v910 = vmul.f32 %v890, %v909
        %911 = vrot.lane.b32.xlu0 %v548, 64
        %v912 = vpop.permute.xlu0 %911
        %v915 = vsel %vm560, %v904, 0
        %917 = vmatprep.subr.mxu0 0.0
        %918 = vmatpush1.msra.mxu0 %v912
        %919 = vmatprep.subr.mxu0 0.0
        %920 = vmatpush1.msra.mxu0 0.0
        %921 = vmatprep.subr.mxu0 0.0
        %922 = vmatpush1.msra.mxu0 0.0
        %923 = vmatprep.subr.mxu0 0.0
        %924 = vmatpush1.msra.mxu0 0.0
        %925 = vmatprep.subr.mxu0 0.0
        %926 = vmatpush1.msra.mxu0 0.0
        %927 = vmatprep.subr.mxu0 0.0
        %928 = vmatpush1.msra.mxu0 0.0
        %929 = vmatprep.subr.mxu0 0.0
        %930 = vmatpush1.msra.mxu0 0.0
        %931 = vmatprep.subr.mxu0 0.0
        %932 = vmatpush1.msra.mxu0 0.0
        %933 = vmatprep.subr.mxu0 0.0
        %934 = vmatpush1.msra.mxu0 0.0
        %935 = vmatprep.subr.mxu0 0.0
        %936 = vmatpush1.msra.mxu0 0.0
        %937 = vmatprep.subr.mxu0 0.0
        %938 = vmatpush1.msra.mxu0 0.0
        %939 = vmatprep.subr.mxu0 0.0
        %940 = vmatpush1.msra.mxu0 0.0
        %941 = vmatprep.subr.mxu0 0.0
        %942 = vmatpush1.msra.mxu0 0.0
        %943 = vmatprep.subr.mxu0 0.0
        %944 = vmatpush1.msra.mxu0 0.0
        %945 = vmatprep.subr.mxu0 0.0
        %946 = vmatpush1.msra.mxu0 0.0
        %947 = vmatprep.subr.mxu0 0.0
        %948 = vmatpush1.msra.mxu0 0.0
        %949 = vmatprep.subr.mxu0 0.0
        %950 = vmatpush1.msra.mxu0 0.0
        %951 = vmatprep.subr.mxu0 0.0
        %952 = vmatpush1.msra.mxu0 0.0
        %953 = vmatprep.subr.mxu0 0.0
        %954 = vmatpush1.msra.mxu0 0.0
        %955 = vmatprep.subr.mxu0 0.0
        %956 = vmatpush1.msra.mxu0 0.0
        %957 = vmatprep.subr.mxu0 0.0
        %958 = vmatpush1.msra.mxu0 0.0
        %959 = vmatprep.subr.mxu0 0.0
        %960 = vmatpush1.msra.mxu0 0.0
        %961 = vmatprep.subr.mxu0 0.0
        %962 = vmatpush1.msra.mxu0 0.0
        %963 = vmatprep.subr.mxu0 0.0
        %964 = vmatpush1.msra.mxu0 0.0
        %965 = vmatprep.subr.mxu0 0.0
        %966 = vmatpush1.msra.mxu0 0.0
        %967 = vmatprep.subr.mxu0 0.0
        %968 = vmatpush1.msra.mxu0 0.0
        %969 = vmatprep.subr.mxu0 0.0
        %970 = vmatpush1.msra.mxu0 0.0
        %971 = vmatprep.subr.mxu0 0.0
        %972 = vmatpush1.msra.mxu0 0.0
        %973 = vmatprep.subr.mxu0 0.0
        %974 = vmatpush1.msra.mxu0 0.0
        %975 = vmatprep.subr.mxu0 0.0
        %976 = vmatpush1.msra.mxu0 0.0
        %977 = vmatprep.subr.mxu0 0.0
        %978 = vmatpush1.msra.mxu0 0.0
        %979 = vmatprep.subr.mxu0 0.0
        %980 = vmatpush1.msra.mxu0 0.0
        %981 = vmatprep.mubr.f32.mxu0 0.0
        %982 = vmatmul.mubr.f32.gmra.mrb[0].mxu0 %v915
        %v983 = vpop.f32.mrb[0].mxu0
        %v984 = vadd.f32 0.0, %v983
        %v985 = vpop.f32.mrb[0].mxu0
        %986 = vdwg.mxu0
        %987 = vrot.lane.b32.xlu0 %v553, 64
        %v988 = vpop.permute.xlu0 %987
        %v991 = vsel %vm560, %v906, 0
        %993 = vmatprep.subr.mxu0 0.0
        %994 = vmatpush1.msra.mxu0 %v988
        %995 = vmatprep.subr.mxu0 0.0
        %996 = vmatpush1.msra.mxu0 0.0
        %997 = vmatprep.subr.mxu0 0.0
        %998 = vmatpush1.msra.mxu0 0.0
        %999 = vmatprep.subr.mxu0 0.0
        %1000 = vmatpush1.msra.mxu0 0.0
        %1001 = vmatprep.subr.mxu0 0.0
        %1002 = vmatpush1.msra.mxu0 0.0
        %1003 = vmatprep.subr.mxu0 0.0
        %1004 = vmatpush1.msra.mxu0 0.0
        %1005 = vmatprep.subr.mxu0 0.0
        %1006 = vmatpush1.msra.mxu0 0.0
        %1007 = vmatprep.subr.mxu0 0.0
        %1008 = vmatpush1.msra.mxu0 0.0
        %1009 = vmatprep.subr.mxu0 0.0
        %1010 = vmatpush1.msra.mxu0 0.0
        %1011 = vmatprep.subr.mxu0 0.0
        %1012 = vmatpush1.msra.mxu0 0.0
        %1013 = vmatprep.subr.mxu0 0.0
        %1014 = vmatpush1.msra.mxu0 0.0
        %1015 = vmatprep.subr.mxu0 0.0
        %1016 = vmatpush1.msra.mxu0 0.0
        %1017 = vmatprep.subr.mxu0 0.0
        %1018 = vmatpush1.msra.mxu0 0.0
        %1019 = vmatprep.subr.mxu0 0.0
        %1020 = vmatpush1.msra.mxu0 0.0
        %1021 = vmatprep.subr.mxu0 0.0
        %1022 = vmatpush1.msra.mxu0 0.0
        %1023 = vmatprep.subr.mxu0 0.0
        %1024 = vmatpush1.msra.mxu0 0.0
        %1025 = vmatprep.subr.mxu0 0.0
        %1026 = vmatpush1.msra.mxu0 0.0
        %1027 = vmatprep.subr.mxu0 0.0
        %1028 = vmatpush1.msra.mxu0 0.0
        %1029 = vmatprep.subr.mxu0 0.0
        %1030 = vmatpush1.msra.mxu0 0.0
        %1031 = vmatprep.subr.mxu0 0.0
        %1032 = vmatpush1.msra.mxu0 0.0
        %1033 = vmatprep.subr.mxu0 0.0
        %1034 = vmatpush1.msra.mxu0 0.0
        %1035 = vmatprep.subr.mxu0 0.0
        %1036 = vmatpush1.msra.mxu0 0.0
        %1037 = vmatprep.subr.mxu0 0.0
        %1038 = vmatpush1.msra.mxu0 0.0
        %1039 = vmatprep.subr.mxu0 0.0
        %1040 = vmatpush1.msra.mxu0 0.0
        %1041 = vmatprep.subr.mxu0 0.0
        %1042 = vmatpush1.msra.mxu0 0.0
        %1043 = vmatprep.subr.mxu0 0.0
        %1044 = vmatpush1.msra.mxu0 0.0
        %1045 = vmatprep.subr.mxu0 0.0
        %1046 = vmatpush1.msra.mxu0 0.0
        %1047 = vmatprep.subr.mxu0 0.0
        %1048 = vmatpush1.msra.mxu0 0.0
        %1049 = vmatprep.subr.mxu0 0.0
        %1050 = vmatpush1.msra.mxu0 0.0
        %1051 = vmatprep.subr.mxu0 0.0
        %1052 = vmatpush1.msra.mxu0 0.0
        %1053 = vmatprep.subr.mxu0 0.0
        %1054 = vmatpush1.msra.mxu0 0.0
        %1055 = vmatprep.subr.mxu0 0.0
        %1056 = vmatpush1.msra.mxu0 0.0
        %1057 = vmatprep.mubr.f32.mxu0 0.0
        %1058 = vmatmul.mubr.f32.gmra.mrb[0].mxu0 %v991
        %v1059 = vpop.f32.mrb[0].mxu0
        %v1060 = vadd.f32 0.0, %v1059
        %v1061 = vpop.f32.mrb[0].mxu0
        %1062 = vdwg.mxu0
        %1063 = vrot.lane.b32.xlu0 %v555, 64
        %v1064 = vpop.permute.xlu0 %1063
        %v1067 = vsel %vm560, %v908, 0
        %1069 = vmatprep.subr.mxu0 0.0
        %1070 = vmatpush1.msra.mxu0 %v1064
        %1071 = vmatprep.subr.mxu0 0.0
        %1072 = vmatpush1.msra.mxu0 0.0
        %1073 = vmatprep.subr.mxu0 0.0
        %1074 = vmatpush1.msra.mxu0 0.0
        %1075 = vmatprep.subr.mxu0 0.0
        %1076 = vmatpush1.msra.mxu0 0.0
        %1077 = vmatprep.subr.mxu0 0.0
        %1078 = vmatpush1.msra.mxu0 0.0
        %1079 = vmatprep.subr.mxu0 0.0
        %1080 = vmatpush1.msra.mxu0 0.0
        %1081 = vmatprep.subr.mxu0 0.0
        %1082 = vmatpush1.msra.mxu0 0.0
        %1083 = vmatprep.subr.mxu0 0.0
        %1084 = vmatpush1.msra.mxu0 0.0
        %1085 = vmatprep.subr.mxu0 0.0
        %1086 = vmatpush1.msra.mxu0 0.0
        %1087 = vmatprep.subr.mxu0 0.0
        %1088 = vmatpush1.msra.mxu0 0.0
        %1089 = vmatprep.subr.mxu0 0.0
        %1090 = vmatpush1.msra.mxu0 0.0
        %1091 = vmatprep.subr.mxu0 0.0
        %1092 = vmatpush1.msra.mxu0 0.0
        %1093 = vmatprep.subr.mxu0 0.0
        %1094 = vmatpush1.msra.mxu0 0.0
        %1095 = vmatprep.subr.mxu0 0.0
        %1096 = vmatpush1.msra.mxu0 0.0
        %1097 = vmatprep.subr.mxu0 0.0
        %1098 = vmatpush1.msra.mxu0 0.0
        %1099 = vmatprep.subr.mxu0 0.0
        %1100 = vmatpush1.msra.mxu0 0.0
        %1101 = vmatprep.subr.mxu0 0.0
        %1102 = vmatpush1.msra.mxu0 0.0
        %1103 = vmatprep.subr.mxu0 0.0
        %1104 = vmatpush1.msra.mxu0 0.0
        %1105 = vmatprep.subr.mxu0 0.0
        %1106 = vmatpush1.msra.mxu0 0.0
        %1107 = vmatprep.subr.mxu0 0.0
        %1108 = vmatpush1.msra.mxu0 0.0
        %1109 = vmatprep.subr.mxu0 0.0
        %1110 = vmatpush1.msra.mxu0 0.0
        %1111 = vmatprep.subr.mxu0 0.0
        %1112 = vmatpush1.msra.mxu0 0.0
        %1113 = vmatprep.subr.mxu0 0.0
        %1114 = vmatpush1.msra.mxu0 0.0
        %1115 = vmatprep.subr.mxu0 0.0
        %1116 = vmatpush1.msra.mxu0 0.0
        %1117 = vmatprep.subr.mxu0 0.0
        %1118 = vmatpush1.msra.mxu0 0.0
        %1119 = vmatprep.subr.mxu0 0.0
        %1120 = vmatpush1.msra.mxu0 0.0
        %1121 = vmatprep.subr.mxu0 0.0
        %1122 = vmatpush1.msra.mxu0 0.0
        %1123 = vmatprep.subr.mxu0 0.0
        %1124 = vmatpush1.msra.mxu0 0.0
        %1125 = vmatprep.subr.mxu0 0.0
        %1126 = vmatpush1.msra.mxu0 0.0
        %1127 = vmatprep.subr.mxu0 0.0
        %1128 = vmatpush1.msra.mxu0 0.0
        %1129 = vmatprep.subr.mxu0 0.0
        %1130 = vmatpush1.msra.mxu0 0.0
        %1131 = vmatprep.subr.mxu0 0.0
        %1132 = vmatpush1.msra.mxu0 0.0
        %1133 = vmatprep.mubr.f32.mxu0 0.0
        %1134 = vmatmul.mubr.f32.gmra.mrb[0].mxu0 %v1067
        %v1135 = vpop.f32.mrb[0].mxu0
        %v1136 = vadd.f32 0.0, %v1135
        %v1137 = vpop.f32.mrb[0].mxu0
        %1138 = vdwg.mxu0
        %1139 = vrot.lane.b32.xlu0 %v557, 64
        %v1140 = vpop.permute.xlu0 %1139
        %v1143 = vsel %vm560, %v910, 0
        %1145 = vmatprep.subr.mxu0 0.0
        %1146 = vmatpush1.msra.mxu0 %v1140
        %1147 = vmatprep.subr.mxu0 0.0
        %1148 = vmatpush1.msra.mxu0 0.0
        %1149 = vmatprep.subr.mxu0 0.0
        %1150 = vmatpush1.msra.mxu0 0.0
        %1151 = vmatprep.subr.mxu0 0.0
        %1152 = vmatpush1.msra.mxu0 0.0
        %1153 = vmatprep.subr.mxu0 0.0
        %1154 = vmatpush1.msra.mxu0 0.0
        %1155 = vmatprep.subr.mxu0 0.0
        %1156 = vmatpush1.msra.mxu0 0.0
        %1157 = vmatprep.subr.mxu0 0.0
        %1158 = vmatpush1.msra.mxu0 0.0
        %1159 = vmatprep.subr.mxu0 0.0
        %1160 = vmatpush1.msra.mxu0 0.0
        %1161 = vmatprep.subr.mxu0 0.0
        %1162 = vmatpush1.msra.mxu0 0.0
        %1163 = vmatprep.subr.mxu0 0.0
        %1164 = vmatpush1.msra.mxu0 0.0
        %1165 = vmatprep.subr.mxu0 0.0
        %1166 = vmatpush1.msra.mxu0 0.0
        %1167 = vmatprep.subr.mxu0 0.0
        %1168 = vmatpush1.msra.mxu0 0.0
        %1169 = vmatprep.subr.mxu0 0.0
        %1170 = vmatpush1.msra.mxu0 0.0
        %1171 = vmatprep.subr.mxu0 0.0
        %1172 = vmatpush1.msra.mxu0 0.0
        %1173 = vmatprep.subr.mxu0 0.0
        %1174 = vmatpush1.msra.mxu0 0.0
        %1175 = vmatprep.subr.mxu0 0.0
        %1176 = vmatpush1.msra.mxu0 0.0
        %1177 = vmatprep.subr.mxu0 0.0
        %1178 = vmatpush1.msra.mxu0 0.0
        %1179 = vmatprep.subr.mxu0 0.0
        %1180 = vmatpush1.msra.mxu0 0.0
        %1181 = vmatprep.subr.mxu0 0.0
        %1182 = vmatpush1.msra.mxu0 0.0
        %1183 = vmatprep.subr.mxu0 0.0
        %1184 = vmatpush1.msra.mxu0 0.0
        %1185 = vmatprep.subr.mxu0 0.0
        %1186 = vmatpush1.msra.mxu0 0.0
        %1187 = vmatprep.subr.mxu0 0.0
        %1188 = vmatpush1.msra.mxu0 0.0
        %1189 = vmatprep.subr.mxu0 0.0
        %1190 = vmatpush1.msra.mxu0 0.0
        %1191 = vmatprep.subr.mxu0 0.0
        %1192 = vmatpush1.msra.mxu0 0.0
        %1193 = vmatprep.subr.mxu0 0.0
        %1194 = vmatpush1.msra.mxu0 0.0
        %1195 = vmatprep.subr.mxu0 0.0
        %1196 = vmatpush1.msra.mxu0 0.0
        %1197 = vmatprep.subr.mxu0 0.0
        %1198 = vmatpush1.msra.mxu0 0.0
        %1199 = vmatprep.subr.mxu0 0.0
        %1200 = vmatpush1.msra.mxu0 0.0
        %1201 = vmatprep.subr.mxu0 0.0
        %1202 = vmatpush1.msra.mxu0 0.0
        %1203 = vmatprep.subr.mxu0 0.0
        %1204 = vmatpush1.msra.mxu0 0.0
        %1205 = vmatprep.subr.mxu0 0.0
        %1206 = vmatpush1.msra.mxu0 0.0
        %1207 = vmatprep.subr.mxu0 0.0
        %1208 = vmatpush1.msra.mxu0 0.0
        %1209 = vmatprep.mubr.f32.mxu0 0.0
        %1210 = vmatmul.mubr.f32.gmra.mrb[0].mxu0 %v1143
        %v1211 = vpop.f32.mrb[0].mxu0
        %v1212 = vadd.f32 0.0, %v1211
        %v1213 = vpop.f32.mrb[0].mxu0
        %1214 = vdwg.mxu0
        %v1215 = vld [vmem:[%s4] sm:$0xff]
        %v1216 = vld [vmem:[%s4 + $0x8] sm:$0xff]
        %v1217 = vld [vmem:[%s4 + $0x10] sm:$0xff]
        %v1218 = vld [vmem:[%s4 + $0x18] sm:$0xff]
        %v1220 = vsel %vm560, %v984, 0
        %1222 = vmatprep.subr.mxu0 0.0
        %1223 = vmatpush1.msra.mxu0 %v1215
        %1224 = vmatprep.subr.mxu0 0.0
        %1225 = vmatpush1.msra.mxu0 0.0
        %1226 = vmatprep.subr.mxu0 0.0
        %1227 = vmatpush1.msra.mxu0 0.0
        %1228 = vmatprep.subr.mxu0 0.0
        %1229 = vmatpush1.msra.mxu0 0.0
        %1230 = vmatprep.subr.mxu0 0.0
        %1231 = vmatpush1.msra.mxu0 0.0
        %1232 = vmatprep.subr.mxu0 0.0
        %1233 = vmatpush1.msra.mxu0 0.0
        %1234 = vmatprep.subr.mxu0 0.0
        %1235 = vmatpush1.msra.mxu0 0.0
        %1236 = vmatprep.subr.mxu0 0.0
        %1237 = vmatpush1.msra.mxu0 0.0
        %1238 = vmatprep.subr.mxu0 0.0
        %1239 = vmatpush1.msra.mxu0 0.0
        %1240 = vmatprep.subr.mxu0 0.0
        %1241 = vmatpush1.msra.mxu0 0.0
        %1242 = vmatprep.subr.mxu0 0.0
        %1243 = vmatpush1.msra.mxu0 0.0
        %1244 = vmatprep.subr.mxu0 0.0
        %1245 = vmatpush1.msra.mxu0 0.0
        %1246 = vmatprep.subr.mxu0 0.0
        %1247 = vmatpush1.msra.mxu0 0.0
        %1248 = vmatprep.subr.mxu0 0.0
        %1249 = vmatpush1.msra.mxu0 0.0
        %1250 = vmatprep.subr.mxu0 0.0
        %1251 = vmatpush1.msra.mxu0 0.0
        %1252 = vmatprep.subr.mxu0 0.0
        %1253 = vmatpush1.msra.mxu0 0.0
        %1254 = vmatprep.subr.mxu0 0.0
        %1255 = vmatpush1.msra.mxu0 0.0
        %1256 = vmatprep.subr.mxu0 0.0
        %1257 = vmatpush1.msra.mxu0 0.0
        %1258 = vmatprep.subr.mxu0 0.0
        %1259 = vmatpush1.msra.mxu0 0.0
        %1260 = vmatprep.subr.mxu0 0.0
        %1261 = vmatpush1.msra.mxu0 0.0
        %1262 = vmatprep.subr.mxu0 0.0
        %1263 = vmatpush1.msra.mxu0 0.0
        %1264 = vmatprep.subr.mxu0 0.0
        %1265 = vmatpush1.msra.mxu0 0.0
        %1266 = vmatprep.subr.mxu0 0.0
        %1267 = vmatpush1.msra.mxu0 0.0
        %1268 = vmatprep.subr.mxu0 0.0
        %1269 = vmatpush1.msra.mxu0 0.0
        %1270 = vmatprep.subr.mxu0 0.0
        %1271 = vmatpush1.msra.mxu0 0.0
        %1272 = vmatprep.subr.mxu0 0.0
        %1273 = vmatpush1.msra.mxu0 0.0
        %1274 = vmatprep.subr.mxu0 0.0
        %1275 = vmatpush1.msra.mxu0 0.0
        %1276 = vmatprep.subr.mxu0 0.0
        %1277 = vmatpush1.msra.mxu0 0.0
        %1278 = vmatprep.subr.mxu0 0.0
        %1279 = vmatpush1.msra.mxu0 0.0
        %1280 = vmatprep.subr.mxu0 0.0
        %1281 = vmatpush1.msra.mxu0 0.0
        %1282 = vmatprep.subr.mxu0 0.0
        %1283 = vmatpush1.msra.mxu0 0.0
        %1284 = vmatprep.subr.mxu0 0.0
        %1285 = vmatpush1.msra.mxu0 0.0
        %1286 = vmatprep.mubr.f32.mxu0 0.0
        %1287 = vmatmul.mubr.f32.gmra.mrb[0].mxu0 %v1220
        %v1288 = vpop.f32.mrb[0].mxu0
        %v1289 = vadd.f32 0.0, %v1288
        %v1290 = vpop.f32.mrb[0].mxu0
        %1291 = vdwg.mxu0
        %v1293 = vsel %vm560, %v1060, 0
        %1295 = vmatprep.subr.mxu0 0.0
        %1296 = vmatpush1.msra.mxu0 %v1216
        %1297 = vmatprep.subr.mxu0 0.0
        %1298 = vmatpush1.msra.mxu0 0.0
        %1299 = vmatprep.subr.mxu0 0.0
        %1300 = vmatpush1.msra.mxu0 0.0
        %1301 = vmatprep.subr.mxu0 0.0
        %1302 = vmatpush1.msra.mxu0 0.0
        %1303 = vmatprep.subr.mxu0 0.0
        %1304 = vmatpush1.msra.mxu0 0.0
        %1305 = vmatprep.subr.mxu0 0.0
        %1306 = vmatpush1.msra.mxu0 0.0
        %1307 = vmatprep.subr.mxu0 0.0
        %1308 = vmatpush1.msra.mxu0 0.0
        %1309 = vmatprep.subr.mxu0 0.0
        %1310 = vmatpush1.msra.mxu0 0.0
        %1311 = vmatprep.subr.mxu0 0.0
        %1312 = vmatpush1.msra.mxu0 0.0
        %1313 = vmatprep.subr.mxu0 0.0
        %1314 = vmatpush1.msra.mxu0 0.0
        %1315 = vmatprep.subr.mxu0 0.0
        %1316 = vmatpush1.msra.mxu0 0.0
        %1317 = vmatprep.subr.mxu0 0.0
        %1318 = vmatpush1.msra.mxu0 0.0
        %1319 = vmatprep.subr.mxu0 0.0
        %1320 = vmatpush1.msra.mxu0 0.0
        %1321 = vmatprep.subr.mxu0 0.0
        %1322 = vmatpush1.msra.mxu0 0.0
        %1323 = vmatprep.subr.mxu0 0.0
        %1324 = vmatpush1.msra.mxu0 0.0
        %1325 = vmatprep.subr.mxu0 0.0
        %1326 = vmatpush1.msra.mxu0 0.0
        %1327 = vmatprep.subr.mxu0 0.0
        %1328 = vmatpush1.msra.mxu0 0.0
        %1329 = vmatprep.subr.mxu0 0.0
        %1330 = vmatpush1.msra.mxu0 0.0
        %1331 = vmatprep.subr.mxu0 0.0
        %1332 = vmatpush1.msra.mxu0 0.0
        %1333 = vmatprep.subr.mxu0 0.0
        %1334 = vmatpush1.msra.mxu0 0.0
        %1335 = vmatprep.subr.mxu0 0.0
        %1336 = vmatpush1.msra.mxu0 0.0
        %1337 = vmatprep.subr.mxu0 0.0
        %1338 = vmatpush1.msra.mxu0 0.0
        %1339 = vmatprep.subr.mxu0 0.0
        %1340 = vmatpush1.msra.mxu0 0.0
        %1341 = vmatprep.subr.mxu0 0.0
        %1342 = vmatpush1.msra.mxu0 0.0
        %1343 = vmatprep.subr.mxu0 0.0
        %1344 = vmatpush1.msra.mxu0 0.0
        %1345 = vmatprep.subr.mxu0 0.0
        %1346 = vmatpush1.msra.mxu0 0.0
        %1347 = vmatprep.subr.mxu0 0.0
        %1348 = vmatpush1.msra.mxu0 0.0
        %1349 = vmatprep.subr.mxu0 0.0
        %1350 = vmatpush1.msra.mxu0 0.0
        %1351 = vmatprep.subr.mxu0 0.0
        %1352 = vmatpush1.msra.mxu0 0.0
        %1353 = vmatprep.subr.mxu0 0.0
        %1354 = vmatpush1.msra.mxu0 0.0
        %1355 = vmatprep.subr.mxu0 0.0
        %1356 = vmatpush1.msra.mxu0 0.0
        %1357 = vmatprep.subr.mxu0 0.0
        %1358 = vmatpush1.msra.mxu0 0.0
        %1359 = vmatprep.mubr.f32.mxu0 0.0
        %1360 = vmatmul.mubr.f32.gmra.mrb[0].mxu0 %v1293
        %v1361 = vpop.f32.mrb[0].mxu0
        %v1362 = vadd.f32 0.0, %v1361
        %v1363 = vpop.f32.mrb[0].mxu0
        %1364 = vdwg.mxu0
        %v1366 = vsel %vm560, %v1136, 0
        %1368 = vmatprep.subr.mxu0 0.0
        %1369 = vmatpush1.msra.mxu0 %v1217
        %1370 = vmatprep.subr.mxu0 0.0
        %1371 = vmatpush1.msra.mxu0 0.0
        %1372 = vmatprep.subr.mxu0 0.0
        %1373 = vmatpush1.msra.mxu0 0.0
        %1374 = vmatprep.subr.mxu0 0.0
        %1375 = vmatpush1.msra.mxu0 0.0
        %1376 = vmatprep.subr.mxu0 0.0
        %1377 = vmatpush1.msra.mxu0 0.0
        %1378 = vmatprep.subr.mxu0 0.0
        %1379 = vmatpush1.msra.mxu0 0.0
        %1380 = vmatprep.subr.mxu0 0.0
        %1381 = vmatpush1.msra.mxu0 0.0
        %1382 = vmatprep.subr.mxu0 0.0
        %1383 = vmatpush1.msra.mxu0 0.0
        %1384 = vmatprep.subr.mxu0 0.0
        %1385 = vmatpush1.msra.mxu0 0.0
        %1386 = vmatprep.subr.mxu0 0.0
        %1387 = vmatpush1.msra.mxu0 0.0
        %1388 = vmatprep.subr.mxu0 0.0
        %1389 = vmatpush1.msra.mxu0 0.0
        %1390 = vmatprep.subr.mxu0 0.0
        %1391 = vmatpush1.msra.mxu0 0.0
        %1392 = vmatprep.subr.mxu0 0.0
        %1393 = vmatpush1.msra.mxu0 0.0
        %1394 = vmatprep.subr.mxu0 0.0
        %1395 = vmatpush1.msra.mxu0 0.0
        %1396 = vmatprep.subr.mxu0 0.0
        %1397 = vmatpush1.msra.mxu0 0.0
        %1398 = vmatprep.subr.mxu0 0.0
        %1399 = vmatpush1.msra.mxu0 0.0
        %1400 = vmatprep.subr.mxu0 0.0
        %1401 = vmatpush1.msra.mxu0 0.0
        %1402 = vmatprep.subr.mxu0 0.0
        %1403 = vmatpush1.msra.mxu0 0.0
        %1404 = vmatprep.subr.mxu0 0.0
        %1405 = vmatpush1.msra.mxu0 0.0
        %1406 = vmatprep.subr.mxu0 0.0
        %1407 = vmatpush1.msra.mxu0 0.0
        %1408 = vmatprep.subr.mxu0 0.0
        %1409 = vmatpush1.msra.mxu0 0.0
        %1410 = vmatprep.subr.mxu0 0.0
        %1411 = vmatpush1.msra.mxu0 0.0
        %1412 = vmatprep.subr.mxu0 0.0
        %1413 = vmatpush1.msra.mxu0 0.0
        %1414 = vmatprep.subr.mxu0 0.0
        %1415 = vmatpush1.msra.mxu0 0.0
        %1416 = vmatprep.subr.mxu0 0.0
        %1417 = vmatpush1.msra.mxu0 0.0
        %1418 = vmatprep.subr.mxu0 0.0
        %1419 = vmatpush1.msra.mxu0 0.0
        %1420 = vmatprep.subr.mxu0 0.0
        %1421 = vmatpush1.msra.mxu0 0.0
        %1422 = vmatprep.subr.mxu0 0.0
        %1423 = vmatpush1.msra.mxu0 0.0
        %1424 = vmatprep.subr.mxu0 0.0
        %1425 = vmatpush1.msra.mxu0 0.0
        %1426 = vmatprep.subr.mxu0 0.0
        %1427 = vmatpush1.msra.mxu0 0.0
        %1428 = vmatprep.subr.mxu0 0.0
        %1429 = vmatpush1.msra.mxu0 0.0
        %1430 = vmatprep.subr.mxu0 0.0
        %1431 = vmatpush1.msra.mxu0 0.0
        %1432 = vmatprep.mubr.f32.mxu0 0.0
        %1433 = vmatmul.mubr.f32.gmra.mrb[0].mxu0 %v1366
        %v1434 = vpop.f32.mrb[0].mxu0
        %v1435 = vadd.f32 0.0, %v1434
        %v1436 = vpop.f32.mrb[0].mxu0
        %1437 = vdwg.mxu0
        %v1439 = vsel %vm560, %v1212, 0
        %1441 = vmatprep.subr.mxu0 0.0
        %1442 = vmatpush1.msra.mxu0 %v1218
        %1443 = vmatprep.subr.mxu0 0.0
        %1444 = vmatpush1.msra.mxu0 0.0
        %1445 = vmatprep.subr.mxu0 0.0
        %1446 = vmatpush1.msra.mxu0 0.0
        %1447 = vmatprep.subr.mxu0 0.0
        %1448 = vmatpush1.msra.mxu0 0.0
        %1449 = vmatprep.subr.mxu0 0.0
        %1450 = vmatpush1.msra.mxu0 0.0
        %1451 = vmatprep.subr.mxu0 0.0
        %1452 = vmatpush1.msra.mxu0 0.0
        %1453 = vmatprep.subr.mxu0 0.0
        %1454 = vmatpush1.msra.mxu0 0.0
        %1455 = vmatprep.subr.mxu0 0.0
        %1456 = vmatpush1.msra.mxu0 0.0
        %1457 = vmatprep.subr.mxu0 0.0
        %1458 = vmatpush1.msra.mxu0 0.0
        %1459 = vmatprep.subr.mxu0 0.0
        %1460 = vmatpush1.msra.mxu0 0.0
        %1461 = vmatprep.subr.mxu0 0.0
        %1462 = vmatpush1.msra.mxu0 0.0
        %1463 = vmatprep.subr.mxu0 0.0
        %1464 = vmatpush1.msra.mxu0 0.0
        %1465 = vmatprep.subr.mxu0 0.0
        %1466 = vmatpush1.msra.mxu0 0.0
        %1467 = vmatprep.subr.mxu0 0.0
        %1468 = vmatpush1.msra.mxu0 0.0
        %1469 = vmatprep.subr.mxu0 0.0
        %1470 = vmatpush1.msra.mxu0 0.0
        %1471 = vmatprep.subr.mxu0 0.0
        %1472 = vmatpush1.msra.mxu0 0.0
        %1473 = vmatprep.subr.mxu0 0.0
        %1474 = vmatpush1.msra.mxu0 0.0
        %1475 = vmatprep.subr.mxu0 0.0
        %1476 = vmatpush1.msra.mxu0 0.0
        %1477 = vmatprep.subr.mxu0 0.0
        %1478 = vmatpush1.msra.mxu0 0.0
        %1479 = vmatprep.subr.mxu0 0.0
        %1480 = vmatpush1.msra.mxu0 0.0
        %1481 = vmatprep.subr.mxu0 0.0
        %1482 = vmatpush1.msra.mxu0 0.0
        %1483 = vmatprep.subr.mxu0 0.0
        %1484 = vmatpush1.msra.mxu0 0.0
        %1485 = vmatprep.subr.mxu0 0.0
        %1486 = vmatpush1.msra.mxu0 0.0
        %1487 = vmatprep.subr.mxu0 0.0
        %1488 = vmatpush1.msra.mxu0 0.0
        %1489 = vmatprep.subr.mxu0 0.0
        %1490 = vmatpush1.msra.mxu0 0.0
        %1491 = vmatprep.subr.mxu0 0.0
        %1492 = vmatpush1.msra.mxu0 0.0
        %1493 = vmatprep.subr.mxu0 0.0
        %1494 = vmatpush1.msra.mxu0 0.0
        %1495 = vmatprep.subr.mxu0 0.0
        %1496 = vmatpush1.msra.mxu0 0.0
        %1497 = vmatprep.subr.mxu0 0.0
        %1498 = vmatpush1.msra.mxu0 0.0
        %1499 = vmatprep.subr.mxu0 0.0
        %1500 = vmatpush1.msra.mxu0 0.0
        %1501 = vmatprep.subr.mxu0 0.0
        %1502 = vmatpush1.msra.mxu0 0.0
        %1503 = vmatprep.subr.mxu0 0.0
        %1504 = vmatpush1.msra.mxu0 0.0
        %1505 = vmatprep.mubr.f32.mxu0 0.0
        %1506 = vmatmul.mubr.f32.gmra.mrb[0].mxu0 %v1439
        %v1507 = vpop.f32.mrb[0].mxu0
        %v1508 = vadd.f32 0.0, %v1507
        %v1509 = vpop.f32.mrb[0].mxu0
        %1510 = vdwg.mxu0
        %v1511 = vsel %vm443, %v1289, 0.0
        %v1512 = vsel %vm443, %v1362, 0.0
        %v1513 = vadd.f32 %v1511, %v1512
        %v1514 = vsel %vm443, %v1435, 0.0
        %v1515 = vadd.f32 %v1513, %v1514
        %v1516 = vsel %vm443, %v1508, 0.0
        %v1517 = vadd.f32 %v1515, %v1516
        %v1518 = vld [vmem:[%s5] sm:$0x1]
        %v1520 = vlaneseq
        %v1521 = vshrl.u32 %v1520, 7
        %v1522 = vsub.s32 0, %v1521
        %v1523 = vrot.slane %v1518, %v1522
        %v1525 = vadd.f32 %v1517, %v1523
        %v1526 = vadd.f32 %v442, %v1525
        %v1527 = vsel %vm443, %v1526, 0.0
        %1528 = vadd.xlane.f32.xlu0 %v1527
        %v1529 = vpop.xlane.xlu0 %1528
        %v1530 = vmul.f32 %v1529, %v447
        %v1531 = vsub.f32 %v1526, %v1530
        %v1532 = vmul.f32 %v1531, %v1531
        %v1533 = vsel %vm443, %v1532, 0.0
        %1534 = vadd.xlane.f32.xlu0 %v1533
        %v1535 = vpop.xlane.xlu0 %1534
        %v1536 = vmul.f32 %v1535, %v447
        %v1537 = vadd.f32 %v1536, 1e-05
        %v1538 = vrsqrt.pop %v1537
        %v1539 = vmul.f32 %v1531, %v1538
        %v1540 = vld [vmem:[%s6] sm:$0x1]
        %v1542 = vlaneseq
        %v1543 = vshrl.u32 %v1542, 7
        %v1544 = vsub.s32 0, %v1543
        %v1545 = vrot.slane %v1540, %v1544
        %v1547 = vmul.f32 %v1539, %v1545
        %v1548 = vld [vmem:[%s7] sm:$0x1]
        %v1550 = vlaneseq
        %v1551 = vshrl.u32 %v1550, 7
        %v1552 = vsub.s32 0, %v1551
        %v1553 = vrot.slane %v1548, %v1552
        %v1555 = vadd.f32 %v1547, %v1553
        %v1556 = vld [vmem:[%s8] sm:$0xff]
        %v1557 = vld [vmem:[%s8 + $0x8] sm:$0xff]
        %v1558 = vld [vmem:[%s8 + $0x10] sm:$0xff]
        %v1559 = vld [vmem:[%s8 + $0x18] sm:$0xff]
        %v1560 = vld [vmem:[#allocation5] sm:$0x1]
        %v1562 = vlaneseq
        %v1563 = vshrl.u32 %v1562, 7
        %v1564 = vsub.s32 0, %v1563
        %v1565 = vrot.slane %v1560, %v1564
        %v1568 = vsel %vm443, %v1555, 0
        %1570 = vmatprep.subr.mxu0 0.0
        %1571 = vmatpush1.msra.mxu0 %v1556
        %1572 = vmatprep.subr.mxu0 0.0
        %1573 = vmatpush1.msra.mxu0 %v1557
        %1574 = vmatprep.subr.mxu0 0.0
        %1575 = vmatpush1.msra.mxu0 %v1558
        %1576 = vmatprep.subr.mxu0 0.0
        %1577 = vmatpush1.msra.mxu0 %v1559
        %1578 = vmatprep.subr.mxu0 0.0
        %1579 = vmatpush1.msra.mxu0 0.0
        %1580 = vmatprep.subr.mxu0 0.0
        %1581 = vmatpush1.msra.mxu0 0.0
        %1582 = vmatprep.subr.mxu0 0.0
        %1583 = vmatpush1.msra.mxu0 0.0
        %1584 = vmatprep.subr.mxu0 0.0
        %1585 = vmatpush1.msra.mxu0 0.0
        %1586 = vmatprep.subr.mxu0 0.0
        %1587 = vmatpush1.msra.mxu0 0.0
        %1588 = vmatprep.subr.mxu0 0.0
        %1589 = vmatpush1.msra.mxu0 0.0
        %1590 = vmatprep.subr.mxu0 0.0
        %1591 = vmatpush1.msra.mxu0 0.0
        %1592 = vmatprep.subr.mxu0 0.0
        %1593 = vmatpush1.msra.mxu0 0.0
        %1594 = vmatprep.subr.mxu0 0.0
        %1595 = vmatpush1.msra.mxu0 0.0
        %1596 = vmatprep.subr.mxu0 0.0
        %1597 = vmatpush1.msra.mxu0 0.0
        %1598 = vmatprep.subr.mxu0 0.0
        %1599 = vmatpush1.msra.mxu0 0.0
        %1600 = vmatprep.subr.mxu0 0.0
        %1601 = vmatpush1.msra.mxu0 0.0
        %1602 = vmatprep.subr.mxu0 0.0
        %1603 = vmatpush1.msra.mxu0 0.0
        %1604 = vmatprep.subr.mxu0 0.0
        %1605 = vmatpush1.msra.mxu0 0.0
        %1606 = vmatprep.subr.mxu0 0.0
        %1607 = vmatpush1.msra.mxu0 0.0
        %1608 = vmatprep.subr.mxu0 0.0
        %1609 = vmatpush1.msra.mxu0 0.0
        %1610 = vmatprep.subr.mxu0 0.0
        %1611 = vmatpush1.msra.mxu0 0.0
        %1612 = vmatprep.subr.mxu0 0.0
        %1613 = vmatpush1.msra.mxu0 0.0
        %1614 = vmatprep.subr.mxu0 0.0
        %1615 = vmatpush1.msra.mxu0 0.0
        %1616 = vmatprep.subr.mxu0 0.0
        %1617 = vmatpush1.msra.mxu0 0.0
        %1618 = vmatprep.subr.mxu0 0.0
        %1619 = vmatpush1.msra.mxu0 0.0
        %1620 = vmatprep.subr.mxu0 0.0
        %1621 = vmatpush1.msra.mxu0 0.0
        %1622 = vmatprep.subr.mxu0 0.0
        %1623 = vmatpush1.msra.mxu0 0.0
        %1624 = vmatprep.subr.mxu0 0.0
        %1625 = vmatpush1.msra.mxu0 0.0
        %1626 = vmatprep.subr.mxu0 0.0
        %1627 = vmatpush1.msra.mxu0 0.0
        %1628 = vmatprep.subr.mxu0 0.0
        %1629 = vmatpush1.msra.mxu0 0.0
        %1630 = vmatprep.subr.mxu0 0.0
        %1631 = vmatpush1.msra.mxu0 0.0
        %1632 = vmatprep.subr.mxu0 0.0
        %1633 = vmatpush1.msra.mxu0 0.0
        %1634 = vmatprep.mubr.f32.mxu0 0.0
        %1635 = vmatmul.mubr.f32.gmra.mrb[0].mxu0 %v1568
        %v1636 = vpop.f32.mrb[0].mxu0
        %v1637 = vadd.f32 %v1565, %v1636
        %v1638 = vpop.f32.mrb[0].mxu0
        %1639 = vdwg.mxu0
        %v1640 = vmul.f32 %v1637, %v1637
        %v1641 = vmul.f32 %v1637, %v1640
        %v1642 = vmul.f32 %v1641, 0.044715
        %v1643 = vadd.f32 %v1637, %v1642
        %v1644 = vmul.f32 %v1643, 0.7978846
        %v1645 = vtanh.pop %v1644
        %v1646 = vadd.f32 %v1645, 1.0
        %v1647 = vmul.f32 %v1646, 0.5
        %v1648 = vmul.f32 %v1637, %v1647
        %v1649 = vld [vmem:[%s10] sm:$0xff]
        %v1650 = vld [vmem:[%s10 + $0x8] sm:$0xff]
        %v1651 = vld [vmem:[%s10 + $0x10] sm:$0xff]
        %v1652 = vld [vmem:[%s10 + $0x18] sm:$0xff]
        %v1653 = vld [vmem:[%s10 + $0x20] sm:$0xff]
        %v1654 = vld [vmem:[%s10 + $0x28] sm:$0xff]
        %v1655 = vld [vmem:[%s10 + $0x30] sm:$0xff]
        %v1656 = vld [vmem:[%s10 + $0x38] sm:$0xff]
        %v1657 = vld [vmem:[%s11] sm:$0x1]
        %v1659 = vlaneseq
        %v1660 = vshrl.u32 %v1659, 7
        %v1661 = vsub.s32 0, %v1660
        %v1662 = vrot.slane %v1657, %v1661
        %vm1664 = vcmask 523264
        %v1666 = vsel %vm1664, %v1648, 0
        %1668 = vmatprep.subr.mxu0 0.0
        %1669 = vmatpush1.msra.mxu0 %v1649
        %1670 = vmatprep.subr.mxu0 0.0
        %1671 = vmatpush1.msra.mxu0 %v1650
        %1672 = vmatprep.subr.mxu0 0.0
        %1673 = vmatpush1.msra.mxu0 %v1651
        %1674 = vmatprep.subr.mxu0 0.0
        %1675 = vmatpush1.msra.mxu0 %v1652
        %1676 = vmatprep.subr.mxu0 0.0
        %1677 = vmatpush1.msra.mxu0 %v1653
        %1678 = vmatprep.subr.mxu0 0.0
        %1679 = vmatpush1.msra.mxu0 %v1654
        %1680 = vmatprep.subr.mxu0 0.0
        %1681 = vmatpush1.msra.mxu0 %v1655
        %1682 = vmatprep.subr.mxu0 0.0
        %1683 = vmatpush1.msra.mxu0 %v1656
        %1684 = vmatprep.subr.mxu0 0.0
        %1685 = vmatpush1.msra.mxu0 0.0
        %1686 = vmatprep.subr.mxu0 0.0
        %1687 = vmatpush1.msra.mxu0 0.0
        %1688 = vmatprep.subr.mxu0 0.0
        %1689 = vmatpush1.msra.mxu0 0.0
        %1690 = vmatprep.subr.mxu0 0.0
        %1691 = vmatpush1.msra.mxu0 0.0
        %1692 = vmatprep.subr.mxu0 0.0
        %1693 = vmatpush1.msra.mxu0 0.0
        %1694 = vmatprep.subr.mxu0 0.0
        %1695 = vmatpush1.msra.mxu0 0.0
        %1696 = vmatprep.subr.mxu0 0.0
        %1697 = vmatpush1.msra.mxu0 0.0
        %1698 = vmatprep.subr.mxu0 0.0
        %1699 = vmatpush1.msra.mxu0 0.0
        %1700 = vmatprep.subr.mxu0 0.0
        %1701 = vmatpush1.msra.mxu0 0.0
        %1702 = vmatprep.subr.mxu0 0.0
        %1703 = vmatpush1.msra.mxu0 0.0
        %1704 = vmatprep.subr.mxu0 0.0
        %1705 = vmatpush1.msra.mxu0 0.0
        %1706 = vmatprep.subr.mxu0 0.0
        %1707 = vmatpush1.msra.mxu0 0.0
        %1708 = vmatprep.subr.mxu0 0.0
        %1709 = vmatpush1.msra.mxu0 0.0
        %1710 = vmatprep.subr.mxu0 0.0
        %1711 = vmatpush1.msra.mxu0 0.0
        %1712 = vmatprep.subr.mxu0 0.0
        %1713 = vmatpush1.msra.mxu0 0.0
        %1714 = vmatprep.subr.mxu0 0.0
        %1715 = vmatpush1.msra.mxu0 0.0
        %1716 = vmatprep.subr.mxu0 0.0
        %1717 = vmatpush1.msra.mxu0 0.0
        %1718 = vmatprep.subr.mxu0 0.0
        %1719 = vmatpush1.msra.mxu0 0.0
        %1720 = vmatprep.subr.mxu0 0.0
        %1721 = vmatpush1.msra.mxu0 0.0
        %1722 = vmatprep.subr.mxu0 0.0
        %1723 = vmatpush1.msra.mxu0 0.0
        %1724 = vmatprep.subr.mxu0 0.0
        %1725 = vmatpush1.msra.mxu0 0.0
        %1726 = vmatprep.subr.mxu0 0.0
        %1727 = vmatpush1.msra.mxu0 0.0
        %1728 = vmatprep.subr.mxu0 0.0
        %1729 = vmatpush1.msra.mxu0 0.0
        %1730 = vmatprep.subr.mxu0 0.0
        %1731 = vmatpush1.msra.mxu0 0.0
        %1732 = vmatprep.mubr.f32.mxu0 0.0
        %1733 = vmatmul.mubr.f32.gmra.mrb[0].mxu0 %v1666
        %v1734 = vpop.f32.mrb[0].mxu0
        %v1735 = vadd.f32 %v1662, %v1734
        %v1736 = vpop.f32.mrb[0].mxu0
        %1737 = vdwg.mxu0
        %v1738 = vadd.f32 %v1526, %v1735
        %1739 = vst.msk [vmem:[%s441] sm:$0xff] %vm443, %v1738
        %s1740 = sand.u32 %s295, 1
        %s1741 = scalar_lea.sflag [#allocation4], %s1740
        %s1742 = sand.u32 %s295, 1
        %s1743 = smul.addr %s1742, 8
        %s1744 = scalar_lea.vmem [#allocation7], %s1743
        // Predicated region
        $region77: #{tpu_custom_call.1} parent=67 // pred_check
          %p1745 = pneg %p305
        $region78: #{tpu_custom_call.1} parent=67 // pred_check_branch
          %1747 = sbr.rel (%p1745) target = $region80
        $region79: #{tpu_custom_call.1} parent=67 // pred_region
          %s1749 = ssub.s32 128, 128
          %1750 = vsyncadd %s1741, %s1749
          %s1751 = smul.addr %s30, 128
          %s1752 = scalar_lea.hbm %s12, %s1751
          %s1754 = sshll.u32 %s1744, 4
          %s1755 = int_to_ptr.vmem [resolvable:$true] %s1754
          %1757 = dma.vmem_to_hbm [thread:$0]  %s1755, 128, %s1752, %s1741
        $region80: #{tpu_custom_call.1} parent=67 // pred_fallthru
          _
      $region68: #{tpu_custom_call.1} parent=5 // pred_fallthru
        _
      %p1758 = scmp.le.s32.totalorder 2, %s25
      // Predicated region
      $region81: #{tpu_custom_call.1} parent=5 // pred_check
        %p1759 = pneg %p1758
      $region82: #{tpu_custom_call.1} parent=5 // pred_check_branch
        %1761 = sbr.rel (%p1759) target = $region84
      $region83: #{tpu_custom_call.1} parent=5 // pred_region
        %s1762 = ssub.s32 %s25, 2
        // Predicated region
        $region85: #{tpu_custom_call.1} parent=83 // pred_check
          %p1763 = pneg %p311
        $region86: #{tpu_custom_call.1} parent=83 // pred_check_branch
          %1765 = sbr.rel (%p1763) target = $region88
        $region87: #{tpu_custom_call.1} parent=83 // pred_region
          %s1766 = sand.u32 %s296, 1
          %s1767 = scalar_lea.sflag [#allocation4], %s1766
          %s1768 = sand.u32 %s296, 1
          %s1769 = smul.addr %s1768, 8
          %s1770 = scalar_lea.vmem [#allocation7], %s1769
          %1771 = dma.done %s1767, 128
        $region88: #{tpu_custom_call.1} parent=83 // pred_fallthru
          _
      $region84: #{tpu_custom_call.1} parent=5 // pred_fallthru
        _
    $region6: #{tpu_custom_call.1} parent=1 // loop_footer
      %s29 = sadd.s32 1, %s25
    $region7: #{tpu_custom_call.1} parent=1 // loop_footer_branch
      %24 = sbr.rel target = $region3
    $region8: #{tpu_custom_call.1} parent=1 // loop_exit
      _
    %1772 = vsyncpa [#allocation3], 1
    %s1773 = scalar_lea.sflag [#allocation3], 1
    %1774 = vsyncpa %s1773, 1
    %1775 = vsyncpa [#allocation6], 1
    %1776 = vsyncpa [#allocation4], 1
    %s1777 = scalar_lea.sflag [#allocation4], 1
    %1778 = vsyncpa %s1777, 1

</llo_original>
